<compile_context>
chip_gen: v7x
topology: tpu7x:2x2x1
jax: 0.10.0
libtpu: 0.0.40
codegen_flags: <defaults>
</compile_context>

<pallas_src>
import math

import jax
import jax.numpy as jnp
from jax.experimental import pallas as pl
from jax.experimental.pallas import tpu as pltpu


def _pick_heads_per_block(num_head, head_dim):
    """Pack enough heads per grid step that the head block is >=128 lanes wide
    (lane-dense weight tiles / concat columns), capped at 512 lanes."""
    best = 1
    for hb in range(1, num_head + 1):
        if num_head % hb:
            continue
        if hb * head_dim > 512:
            break
        best = hb
        if hb * head_dim >= 128:
            break
    return best


def _pick_query_tile(seq_len):
    """Full rows for short sequences; 128/256-row tiles for long ones so the
    logits / concat scratch stay VMEM-bounded and a second parallel grid axis
    exists (v7x has 2 TensorCores)."""
    if seq_len <= 256:
        return seq_len
    for t in (256, 128):
        if seq_len % t == 0:
            return t
    return seq_len


def _make_mha_kernel(N, Hb, Dh, tq, QT, HB):
    W = Hb * Dh  # head-block width in lanes

    def kernel(x_ref, wqkv_ref, bqkv_ref, wo_ref, bo_ref, o_ref, concat_ref):
        hb = pl.program_id(2)

        x = x_ref[0]                                            # (N, D) bf16

        # ONE fused Q/K/V projection GEMM for this head block (one weight DMA,
        # 3*W-wide MXU output).  1/sqrt(Dh) is pre-folded into the Q columns.
        qkv = (jnp.dot(x, wqkv_ref[0], preferred_element_type=jnp.float32)
               + bqkv_ref[0])                                   # (N, 3W) f32

        # Single bf16 cast per tensor, immediately after the bias add.
        if QT == 1:
            q = qkv[:, 0 * W:1 * W].astype(jnp.bfloat16)        # (tq=N, W)
        else:
            # Query-row tile of this grid step (k/v stay full length).
            row0 = pl.program_id(1) * tq
            q = jax.lax.dynamic_slice_in_dim(qkv, row0, tq, axis=0)
            q = q[:, 0 * W:1 * W].astype(jnp.bfloat16)          # (tq, W)
        k = qkv[:, 1 * W:2 * W].astype(jnp.bfloat16)            # (N, W)
        v = qkv[:, 2 * W:3 * W].astype(jnp.bfloat16)            # (N, W)

        # Batched attention over the Hb heads of this block (no per-head loop).
        qh = jnp.swapaxes(q.reshape(tq, Hb, Dh), 0, 1)          # (Hb, tq, Dh)
        kh = jnp.swapaxes(k.reshape(N, Hb, Dh), 0, 1)           # (Hb, N, Dh)
        vh = jnp.swapaxes(v.reshape(N, Hb, Dh), 0, 1)           # (Hb, N, Dh)

        s = jnp.einsum('hqd,hkd->hqk', qh, kh,
                       preferred_element_type=jnp.float32)      # (Hb, tq, N)

        # Numerically stable softmax.  Exact row reciprocal (only Hb*tq values)
        # and the normalize + bf16 cast fused into one pass over the logits.
        s = s - jnp.max(s, axis=-1, keepdims=True)
        e = jnp.exp(s)
        inv = 1.0 / jnp.sum(e, axis=-1, keepdims=True)
        p = (e * inv).astype(jnp.bfloat16)                      # (Hb, tq, N)

        oh = jnp.einsum('hqk,hkd->hqd', p, vh,
                        preferred_element_type=jnp.float32)     # (Hb, tq, Dh)

        # Head-concat by store: this block's W columns of the (tq, D) slab.
        concat_ref[hb] = (jnp.swapaxes(oh, 0, 1)
                          .reshape(tq, W).astype(jnp.bfloat16))

        # After the last head block: ONE full-depth (tq, D) @ (D, Dp) output
        # GEMM + bias (replaces the per-head Wo GEMMs + f32 accumulator).
        @pl.when(hb == HB - 1)
        def _():
            c = jnp.swapaxes(concat_ref[...], 0, 1).reshape(tq, HB * W)
            out = (jnp.dot(c, wo_ref[...], preferred_element_type=jnp.float32)
                   + bo_ref[...])                               # (tq, Dp) f32
            o_ref[0] = out.astype(o_ref.dtype)

    return kernel


def multihead_attention(x, params, num_head):
    """x: (B, N, D). params = (wq, bq, wk, bk, wv, bv, wo, bo) with weights
    stored as (in, out) so y = x @ W + b (== PyTorch x @ W.T + b)."""
    wq, bq, wk, bk, wv, bv, wo, bo = params
    B, N, D = x.shape
    H = num_head
    Dh = D // H
    assert H * Dh == D

    Hb = _pick_heads_per_block(H, Dh)     # heads packed per grid step
    HB = H // Hb                          # head-block grid extent
    W = Hb * Dh                           # head-block width (lanes)
    tq = _pick_query_tile(N)
    QT = N // tq
    Dp = ((D + 127) // 128) * 128         # lane-dense output width
    scale = 1.0 / math.sqrt(Dh)

    # ------------- host-side layout plumbing (one-time) -------------
    def col_blocks(w):                    # (D, D) -> (HB, D, W) per-block cols
        return jnp.transpose(w.reshape(D, HB, Hb, Dh),
                             (1, 0, 2, 3)).reshape(HB, D, W)

    def bias_blocks(b):                   # (D,) -> (HB, 1, W)
        return b.reshape(HB, 1, W)

    # Fused QKV weight / bias per head block; 1/sqrt(Dh) folded into Q.
    w_qkv = jnp.concatenate(
        [col_blocks(wq * scale), col_blocks(wk), col_blocks(wv)],
        axis=-1).astype(jnp.bfloat16)                       # (HB, D, 3W)
    b_qkv = jnp.concatenate(
        [bias_blocks(bq * scale), bias_blocks(bk), bias_blocks(bv)],
        axis=-1).astype(jnp.float32)                        # (HB, 1, 3W)

    # Output projection: columns zero-padded to a 128-lane multiple so the
    # output block stores are unmasked; the pad is sliced off below.
    wo_p = jnp.pad(wo, ((0, 0), (0, Dp - D))).astype(jnp.bfloat16)   # (D, Dp)
    bo_p = jnp.pad(bo, (0, Dp - D)).reshape(1, Dp).astype(jnp.float32)

    x_bf = x.astype(jnp.bfloat16)

    # ------------- BlockSpecs -------------
    if HB > 1:
        # Weight stream is re-fetched once per head block: buffer it deeper so
        # the short per-block compute doesn't expose the HBM fetch.
        wqkv_spec = pl.BlockSpec((1, D, 3 * W), lambda b, qi, hb: (hb, 0, 0),
                                 pipeline_mode=pl.Buffered(3))
    else:
        # Single head block: constant index map -> fused weights are DMA'd
        # once and stay VMEM-resident across the whole batch.
        wqkv_spec = pl.BlockSpec((1, D, 3 * W), lambda b, qi, hb: (0, 0, 0))

    in_specs = [
        pl.BlockSpec((1, N, D), lambda b, qi, hb: (b, 0, 0)),       # x (per batch)
        wqkv_spec,                                                  # fused W_qkv
        pl.BlockSpec((1, 1, 3 * W), lambda b, qi, hb: (hb, 0, 0)),  # fused b_qkv
        pl.BlockSpec((D, Dp), lambda b, qi, hb: (0, 0)),            # W_o (resident)
        pl.BlockSpec((1, Dp), lambda b, qi, hb: (0, 0)),            # b_o (resident)
    ]
    out_specs = pl.BlockSpec((1, tq, Dp), lambda b, qi, hb: (b, qi, 0))

    kernel = _make_mha_kernel(N, Hb, Dh, tq, QT, HB)

    # ------------- VMEM budget / cost hint -------------
    est = (2 * N * D * 2                  # x block (double-buffered, bf16)
           + 2 * D * 3 * W * 2            # fused QKV weight block
           + 2 * D * Dp * 2               # W_o
           + 2 * tq * Dp * x.dtype.itemsize   # output block
           + HB * tq * W * 2              # concat scratch
           + N * 3 * W * 4                # qkv (f32)
           + (tq + 2 * N) * W * 2         # q / k / v (bf16)
           + 4 * Hb * tq * N * 4          # logits working set (s, e, p)
           + tq * Dp * 4)                 # output GEMM result
    try:
        vmem_cap = int(pltpu.get_tpu_info().vmem_capacity_bytes)
    except Exception:
        vmem_cap = 64 * 1024 * 1024       # conservative (v7x) default
    vmem_limit = int(min(int(0.9 * vmem_cap),
                         max(32 * 1024 * 1024, 2 * est)))

    flops = (2 * B * N * D * 3 * D        # fused QKV projections
             + 4 * B * H * N * N * Dh     # scores + attention @ V
             + 2 * B * N * D * Dp)        # output projection
    transcendentals = B * H * N * N
    bytes_accessed = (x_bf.size * 2 + B * QT * w_qkv.size * 2 + wo_p.size * 2
                      + b_qkv.size * 4 + bo_p.size * 4
                      + B * N * Dp * x.dtype.itemsize)

    out_p = pl.pallas_call(
        kernel,
        out_shape=jax.ShapeDtypeStruct((B, N, Dp), x.dtype),
        grid=(B, QT, HB),
        in_specs=in_specs,
        out_specs=out_specs,
        scratch_shapes=[pltpu.VMEM((HB, tq, W), jnp.bfloat16)],
        compiler_params=pltpu.CompilerParams(
            dimension_semantics=("parallel", "parallel", "arbitrary"),
            vmem_limit_bytes=vmem_limit),
        cost_estimate=pl.CostEstimate(
            flops=int(flops),
            transcendentals=int(transcendentals),
            bytes_accessed=int(bytes_accessed)),
    )(x_bf, w_qkv, b_qkv, wo_p, bo_p)

    return out_p[..., :D] if Dp != D else out_p


def init_params(key, D):
    ks = jax.random.split(key, 8)
    s = 0.1

    def w(k, shape):
        return (s * jax.random.normal(k, shape)).astype(jnp.float32)

    return (w(ks[0], (D, D)), w(ks[1], (D,)),     # q proj
            w(ks[2], (D, D)), w(ks[3], (D,)),     # k proj
            w(ks[4], (D, D)), w(ks[5], (D,)),     # v proj
            w(ks[6], (D, D)), w(ks[7], (D,)))     # output proj


def reference(x, params, num_head):
    wq, bq, wk, bk, wv, bv, wo, bo = params
    B, N, D = x.shape
    Dh = D // num_head

    def heads(z):
        return z.reshape(B, N, num_head, Dh).transpose(0, 2, 1, 3)

    q, k, v = heads(x @ wq + bq), heads(x @ wk + bk), heads(x @ wv + bv)
    att = jax.nn.softmax(q @ jnp.swapaxes(k, -1, -2) / math.sqrt(Dh), axis=-1)
    out = (att @ v).transpose(0, 2, 1, 3).reshape(B, N, D)
    return out @ wo + bo


if __name__ == "__main__":
    B, N, D, H = 2, 8, 32, 4
    key = jax.random.PRNGKey(0)
    kx, kp = jax.random.split(key)
    x = jax.random.normal(kx, (B, N, D), jnp.float32)
    params = init_params(kp, D)

    out = multihead_attention(x, params, num_head=H)
    out = jax.block_until_ready(out)

    ref = reference(x, params, H)
    assert out.shape == (B, N, D)
    err = float(jnp.max(jnp.abs(out - ref)))
    # bf16 weights/activations (f32 accumulation) => loosened tolerance vs f32 ref.
    assert jnp.allclose(out, ref, atol=3e-2, rtol=3e-2), f"mismatch vs reference: {err}"
    print("KERNEL_OK")
</pallas_src>

<mosaic_0001>
module attributes {stable_mosaic.version = 11 : i64} {
  func.func @kernel(%arg0: i32, %arg1: i32, %arg2: i32, %arg3: memref<1x8x32xbf16, #tpu.memory_space<vmem>>, %arg4: memref<1x32x96xbf16, #tpu.memory_space<vmem>>, %arg5: memref<1x1x96xf32, #tpu.memory_space<vmem>>, %arg6: memref<32x128xbf16, #tpu.memory_space<vmem>>, %arg7: memref<1x128xf32, #tpu.memory_space<vmem>>, %arg8: memref<1x8x128xf32, #tpu.memory_space<vmem>>, %arg9: memref<1x8x32xbf16, #tpu.memory_space<vmem>>) attributes {dimension_semantics = [#tpu.dimension_semantics<parallel>, #tpu.dimension_semantics<parallel>, #tpu.dimension_semantics<arbitrary>], iteration_bounds = array<i64: 2, 1, 1>, scalar_prefetch = 0 : i64, scratch_operands = 1 : i64, tpu.core_type = #tpu.core_type<tc>, window_params = [{transform_indices = @transform_0, window_bounds = array<i64: 1, 8, 32>}, {pipeline_mode = #tpu.pipeline_mode<synchronous>, transform_indices = @transform_1, window_bounds = array<i64: 1, 32, 96>}, {transform_indices = @transform_2, window_bounds = array<i64: 1, 1, 96>}, {pipeline_mode = #tpu.pipeline_mode<synchronous>, transform_indices = @transform_3, window_bounds = array<i64: 32, 128>}, {pipeline_mode = #tpu.pipeline_mode<synchronous>, transform_indices = @transform_4, window_bounds = array<i64: 1, 128>}, {transform_indices = @transform_5, window_bounds = array<i64: 1, 8, 128>}]} {
    %c0 = arith.constant 0 : index
    %c0_0 = arith.constant 0 : index
    %c0_1 = arith.constant 0 : index
    %0 = vector.load %arg3[%c0, %c0_0, %c0_1] : memref<1x8x32xbf16, #tpu.memory_space<vmem>>, vector<1x8x32xbf16>
    %1 = vector.shape_cast %0 : vector<1x8x32xbf16> to vector<8x32xbf16>
    %c0_2 = arith.constant 0 : index
    %c0_3 = arith.constant 0 : index
    %c0_4 = arith.constant 0 : index
    %2 = vector.load %arg4[%c0_2, %c0_3, %c0_4] : memref<1x32x96xbf16, #tpu.memory_space<vmem>>, vector<1x32x96xbf16>
    %3 = vector.shape_cast %2 : vector<1x32x96xbf16> to vector<32x96xbf16>
    %cst = arith.constant dense<0.000000e+00> : vector<8x96xf32>
    %4 = tpu.matmul %1, %3, %cst {dimension_numbers = #tpu.dot_dimension_numbers<[1], [0], [0], [1], [0, 0, 1, 1], [], []>} : vector<8x32xbf16>, vector<32x96xbf16>, vector<8x96xf32> -> vector<8x96xf32>
    %c0_5 = arith.constant 0 : index
    %c0_6 = arith.constant 0 : index
    %c0_7 = arith.constant 0 : index
    %5 = vector.load %arg5[%c0_5, %c0_6, %c0_7] : memref<1x1x96xf32, #tpu.memory_space<vmem>>, vector<1x1x96xf32>
    %6 = vector.shape_cast %5 : vector<1x1x96xf32> to vector<1x96xf32>
    %7 = vector.broadcast %6 : vector<1x96xf32> to vector<8x96xf32>
    %8 = arith.addf %4, %7 : vector<8x96xf32>
    %9 = vector.extract_strided_slice %8 {offsets = [0, 0], sizes = [8, 32], strides = [1, 1]} : vector<8x96xf32> to vector<8x32xf32>
    %10 = arith.truncf %9 : vector<8x32xf32> to vector<8x32xbf16>
    %11 = vector.extract_strided_slice %8 {offsets = [0, 32], sizes = [8, 32], strides = [1, 1]} : vector<8x96xf32> to vector<8x32xf32>
    %12 = arith.truncf %11 : vector<8x32xf32> to vector<8x32xbf16>
    %13 = vector.extract_strided_slice %8 {offsets = [0, 64], sizes = [8, 32], strides = [1, 1]} : vector<8x96xf32> to vector<8x32xf32>
    %14 = arith.truncf %13 : vector<8x32xf32> to vector<8x32xbf16>
    %15 = vector.shape_cast %10 : vector<8x32xbf16> to vector<8x4x8xbf16>
    %16 = tpu.transpose %15, [1, 0, 2] : vector<8x4x8xbf16> -> vector<4x8x8xbf16>
    %17 = vector.shape_cast %12 : vector<8x32xbf16> to vector<8x4x8xbf16>
    %18 = tpu.transpose %17, [1, 0, 2] : vector<8x4x8xbf16> -> vector<4x8x8xbf16>
    %19 = vector.shape_cast %14 : vector<8x32xbf16> to vector<8x4x8xbf16>
    %20 = tpu.transpose %19, [1, 0, 2] : vector<8x4x8xbf16> -> vector<4x8x8xbf16>
    "tpu.trace_start"() <{level = 10 : i32, message = "hqd,hkd->hqk"}> : () -> ()
    %cst_8 = arith.constant dense<0.000000e+00> : vector<4x8x8xf32>
    %21 = tpu.matmul %16, %18, %cst_8 {dimension_numbers = #tpu.dot_dimension_numbers<[2], [2], [1], [1], [0, 0, 0, 1, 1, 1], [0], [0]>} : vector<4x8x8xbf16>, vector<4x8x8xbf16>, vector<4x8x8xf32> -> vector<4x8x8xf32>
    "tpu.trace_stop"() : () -> ()
    %cst_9 = arith.constant dense<0xFF800000> : vector<4x8xf32>
    %22 = vector.multi_reduction <maximumf>, %21, %cst_9 [2] : vector<4x8x8xf32> to vector<4x8xf32>
    %23 = vector.shape_cast %22 : vector<4x8xf32> to vector<4x8x1xf32>
    %24 = vector.broadcast %23 : vector<4x8x1xf32> to vector<4x8x8xf32>
    %25 = arith.subf %21, %24 : vector<4x8x8xf32>
    %26 = math.exp %25 : vector<4x8x8xf32>
    %cst_10 = arith.constant dense<0.000000e+00> : vector<4x8xf32>
    %27 = vector.multi_reduction <add>, %26, %cst_10 [2] : vector<4x8x8xf32> to vector<4x8xf32>
    %28 = vector.shape_cast %27 : vector<4x8xf32> to vector<4x8x1xf32>
    %cst_11 = arith.constant 1.000000e+00 : f32
    %29 = vector.broadcast %cst_11 : f32 to vector<4x8x1xf32>
    %30 = arith.divf %29, %28 : vector<4x8x1xf32>
    %31 = vector.broadcast %30 : vector<4x8x1xf32> to vector<4x8x8xf32>
    %32 = arith.mulf %26, %31 : vector<4x8x8xf32>
    %33 = arith.truncf %32 : vector<4x8x8xf32> to vector<4x8x8xbf16>
    "tpu.trace_start"() <{level = 10 : i32, message = "hqk,hkd->hqd"}> : () -> ()
    %cst_12 = arith.constant dense<0.000000e+00> : vector<4x8x8xf32>
    %34 = tpu.matmul %33, %20, %cst_12 {dimension_numbers = #tpu.dot_dimension_numbers<[2], [1], [1], [2], [0, 0, 0, 1, 1, 2], [0], [0]>} : vector<4x8x8xbf16>, vector<4x8x8xbf16>, vector<4x8x8xf32> -> vector<4x8x8xf32>
    "tpu.trace_stop"() : () -> ()
    %35 = tpu.transpose %34, [1, 0, 2] : vector<4x8x8xf32> -> vector<8x4x8xf32>
    %36 = vector.shape_cast %35 : vector<8x4x8xf32> to vector<8x32xf32>
    %37 = arith.truncf %36 : vector<8x32xf32> to vector<8x32xbf16>
    %38 = arith.index_cast %arg2 : i32 to index
    %c0_13 = arith.constant 0 : index
    %c0_14 = arith.constant 0 : index
    %39 = vector.load %arg9[%38, %c0_13, %c0_14] : memref<1x8x32xbf16, #tpu.memory_space<vmem>>, vector<1x8x32xbf16>
    %40 = vector.shape_cast %39 : vector<1x8x32xbf16> to vector<8x32xbf16>
    %41 = vector.shape_cast %37 : vector<8x32xbf16> to vector<1x8x32xbf16>
    tpu.vector_store %arg9[%38, %c0_13, %c0_14], %41 {strides = array<i32>} : memref<1x8x32xbf16, #tpu.memory_space<vmem>>, vector<1x8x32xbf16>,
    %c0_i32 = arith.constant 0 : i32
    %42 = arith.cmpi eq, %arg2, %c0_i32 : i32
    %43 = arith.extui %42 : i1 to i32
    %c0_i32_15 = arith.constant 0 : i32
    %44 = arith.cmpi ne, %43, %c0_i32_15 : i32
    scf.if %44 {
      %c0_16 = arith.constant 0 : index
      %c0_17 = arith.constant 0 : index
      %c0_18 = arith.constant 0 : index
      %45 = vector.load %arg9[%c0_16, %c0_17, %c0_18] : memref<1x8x32xbf16, #tpu.memory_space<vmem>>, vector<1x8x32xbf16>
      %46 = tpu.transpose %45, [1, 0, 2] : vector<1x8x32xbf16> -> vector<8x1x32xbf16>
      %47 = vector.shape_cast %46 : vector<8x1x32xbf16> to vector<8x32xbf16>
      %c0_19 = arith.constant 0 : index
      %c0_20 = arith.constant 0 : index
      %48 = vector.load %arg6[%c0_19, %c0_20] : memref<32x128xbf16, #tpu.memory_space<vmem>>, vector<32x128xbf16>
      %cst_21 = arith.constant dense<0.000000e+00> : vector<8x128xf32>
      %49 = tpu.matmul %47, %48, %cst_21 {dimension_numbers = #tpu.dot_dimension_numbers<[1], [0], [0], [1], [0, 0, 1, 1], [], []>} : vector<8x32xbf16>, vector<32x128xbf16>, vector<8x128xf32> -> vector<8x128xf32>
      %c0_22 = arith.constant 0 : index
      %c0_23 = arith.constant 0 : index
      %50 = vector.load %arg7[%c0_22, %c0_23] : memref<1x128xf32, #tpu.memory_space<vmem>>, vector<1x128xf32>
      %51 = vector.broadcast %50 : vector<1x128xf32> to vector<8x128xf32>
      %52 = arith.addf %49, %51 : vector<8x128xf32>
      %c0_24 = arith.constant 0 : index
      %c0_25 = arith.constant 0 : index
      %c0_26 = arith.constant 0 : index
      %53 = vector.load %arg8[%c0_24, %c0_25, %c0_26] : memref<1x8x128xf32, #tpu.memory_space<vmem>>, vector<1x8x128xf32>
      %54 = vector.shape_cast %53 : vector<1x8x128xf32> to vector<8x128xf32>
      %55 = vector.shape_cast %52 : vector<8x128xf32> to vector<1x8x128xf32>
      tpu.vector_store %arg8[%c0_24, %c0_25, %c0_26], %55 {strides = array<i32>} : memref<1x8x128xf32, #tpu.memory_space<vmem>>, vector<1x8x128xf32>,
    } else {
    }
    return
  }
  func.func @transform_0(%arg0: i32, %arg1: i32, %arg2: i32) -> (i32, i32, i32) {
    %c0_i32 = arith.constant 0 : i32
    %c0_i32_0 = arith.constant 0 : i32
    %c0_i32_1 = arith.constant 0 : i32
    return %arg0, %c0_i32, %c0_i32_0 : i32, i32, i32
  }
  func.func @transform_1(%arg0: i32, %arg1: i32, %arg2: i32) -> (i32, i32, i32) {
    %c0_i32 = arith.constant 0 : i32
    %c0_i32_0 = arith.constant 0 : i32
    %c0_i32_1 = arith.constant 0 : i32
    %c0_i32_2 = arith.constant 0 : i32
    return %c0_i32, %c0_i32_0, %c0_i32_1 : i32, i32, i32
  }
  func.func @transform_2(%arg0: i32, %arg1: i32, %arg2: i32) -> (i32, i32, i32) {
    %c0_i32 = arith.constant 0 : i32
    %c0_i32_0 = arith.constant 0 : i32
    %c0_i32_1 = arith.constant 0 : i32
    return %arg2, %c0_i32, %c0_i32_0 : i32, i32, i32
  }
  func.func @transform_3(%arg0: i32, %arg1: i32, %arg2: i32) -> (i32, i32) {
    %c0_i32 = arith.constant 0 : i32
    %c0_i32_0 = arith.constant 0 : i32
    %c0_i32_1 = arith.constant 0 : i32
    return %c0_i32, %c0_i32_0 : i32, i32
  }
  func.func @transform_4(%arg0: i32, %arg1: i32, %arg2: i32) -> (i32, i32) {
    %c0_i32 = arith.constant 0 : i32
    %c0_i32_0 = arith.constant 0 : i32
    %c0_i32_1 = arith.constant 0 : i32
    return %c0_i32, %c0_i32_0 : i32, i32
  }
  func.func @transform_5(%arg0: i32, %arg1: i32, %arg2: i32) -> (i32, i32, i32) {
    %c0_i32 = arith.constant 0 : i32
    %c0_i32_0 = arith.constant 0 : i32
    return %arg0, %arg1, %c0_i32 : i32, i32, i32
  }
}

</mosaic_0001>

<llo_original>
// kernel: tpu_custom_call.1
$region0: #{tpu_custom_call.1}
  #allocation0 [shape = 'u32[]', space=smem, size = 0x4, offset = 0x4, fixed_abs, tag = 'smem constant byte address 0x4 - core index']
  #allocation1 [shape = 'u32[144,128]{1,0:T(1,128)}', space=vmem, size = 0x12000, scoped, tag = 'internal scratch']
  #allocation2 [shape = 'bf16[1,8,32]{2,1,0:T(8,128)(2,1)}', space=vmem, size = 0x800, scoped, tag = 'scratch operand']
  %s0 = inlined_call_operand.hbm [shape: bf16[2,8,32], index: 0, kind: input, shape index: {}]
  %s1 = inlined_call_operand.hbm [shape: bf16[1,32,96], index: 1, kind: input, shape index: {}]
  %s2 = inlined_call_operand.vmem [shape: f32[1,1,96], index: 2, kind: input, shape index: {}]
  %s3 = inlined_call_operand.hbm [shape: bf16[32,128], index: 3, kind: input, shape index: {}]
  %s4 = inlined_call_operand.vmem [shape: f32[1,128], index: 4, kind: input, shape index: {}]
  %s5 = inlined_call_operand.hbm [shape: f32[2,8,128], index: 5, kind: output, shape index: {}]
  %s6 = sld [smem:[#allocation0]]
  $region69: #{tpu_custom_call.1} parent=0
    _
  %s8 = ssub.s32 1, %s6
  %s9 = scalar_select 0, %s8, %s6
  $region1: #{tpu_custom_call.1} parent=0
    #allocation3 [shape = 'u8[4096]{0}', space=vmem, size = 0x1000, scoped, tag = 'input window, operand 0']
    #allocation4 [shape = 's32[2]{0}', space=sflag, size = 0x8, scoped, tag = 'scoped memory for tpu_custom_call.1']
    #allocation5 [shape = 's32[2]{0}', space=sflag, size = 0x8, scoped, tag = 'scoped memory for tpu_custom_call.1']
    #allocation6 [shape = 'u8[8192]{0}', space=vmem, size = 0x2000, scoped, tag = 'input window, operand 1, single buffered']
    #allocation7 [shape = 's32[1]{0}', space=sflag, size = 0x4, scoped, tag = 'scoped memory for tpu_custom_call.1']
    #allocation8 [shape = 'u8[8192]{0}', space=vmem, size = 0x2000, scoped, tag = 'input window, operand 3, single buffered']
    #allocation9 [shape = 'u8[8192]{0}', space=vmem, size = 0x2000, scoped, tag = 'output window, operand 0']
    %10 = vsyncpa [#allocation4], 0
    %s11 = scalar_lea.sflag [#allocation4], 1
    %12 = vsyncpa %s11, 0
    %13 = vsyncpa [#allocation7], 0
    %14 = vsyncpa [#allocation5], 0
    %s15 = scalar_lea.sflag [#allocation5], 1
    %16 = vsyncpa %s15, 0
    loop: start=0, step=1, limit=4
    $region2: #{tpu_custom_call.1} parent=1 // loop_pre_header
      _
    $region3: #{tpu_custom_call.1} parent=1 // loop_header
      %s18 = sphi 0, %s22
      %p19 = scmp.ge.s32.totalorder %s18, 4
      %s25 = sphi 0, %s44
      %s26 = sphi 0, %s40
      %s27 = sphi 0, %s36
      %s28 = sphi 0, %s25
      %s29 = sphi 0, %s26
      %s30 = sphi 0, %s27
      %s31 = sphi 0, %s28
      %s32 = sphi 0, %s29
      %s33 = sphi 0, %s30
      %s47 = sphi 0, %s49
      %s50 = sphi 0, %s47
      %s51 = sphi 0, %s50
      %s67 = sphi 0, %s51
      %s71 = sphi 0, %s71
      %s73 = sphi 0, %s71
      %s74 = sphi 0, %s73
      %s88 = sphi 0, %s74
      %s94 = sphi 0, %s96
      %s97 = sphi 0, %s94
      %s98 = sphi 0, %s97
      %s114 = sphi 0, %s98
      %s118 = sphi 0, %s118
      %s120 = sphi 0, %s118
      %s121 = sphi 0, %s120
      %s135 = sphi 0, %s121
      %s139 = sphi 0, %s139
      %s141 = sphi 0, %s139
      %s142 = sphi 0, %s141
      %s156 = sphi 0, %s142
      %s164 = sphi 0, %s166
      %s167 = sphi 0, %s164
      %s168 = sphi 0, %s167
      %s184 = sphi 0, %s168
    $region4: #{tpu_custom_call.1} parent=1 // loop_header_branch
      %21 = sbr.rel (%p19) target = $region8
    $region5: #{tpu_custom_call.1} parent=1 // loop_body
      %s23 = ssub.s32 %s18, 1
      %s24 = ssub.s32 %s18, 2
      %s34 = sadd.s32 1, %s27
      %p35 = scmp.ge.s32.totalorder %s34, 1
      %s36 = scalar_select %p35, 0, %s34
      %s37 = sadd.s32 1, %s26
      %s38 = scalar_select %p35, %s37, %s26
      %p39 = scmp.ge.s32.totalorder %s38, 1
      %s40 = scalar_select %p39, 0, %s38
      %s41 = sadd.s32 1, %s25
      %s42 = scalar_select %p39, %s41, %s25
      %p43 = scmp.ge.s32.totalorder %s42, 2
      %s44 = scalar_select %p43, 0, %s42
      %s45 = ssub.s32 %s25, %s44
      %p46 = scmp.eq.s32.totalorder %s45, 0
      %s48 = sadd.s32 %s47, 1
      %s49 = scalar_select %p46, %s47, %s48
      %p52 = pneg %p46
      %p53 = scmp.eq.s32.totalorder %s18, 1
      %p54 = por %p52, %p53
      %p55 = scmp.ne.s32.totalorder %s47, %s50
      %p56 = scmp.eq.s32.totalorder %s18, 0
      %p57 = por %p55, %p56
      %p58 = scmp.ne.s32.totalorder %s47, %s50
      %p59 = scmp.eq.s32.totalorder %s23, 1
      %p60 = por %p58, %p59
      %p61 = scmp.ne.s32.totalorder %s50, %s51
      %p62 = scmp.eq.s32.totalorder %s23, 0
      %p63 = por %p61, %p62
      %p64 = scmp.ne.s32.totalorder %s50, %s51
      %p65 = scmp.eq.s32.totalorder %s24, 1
      %p66 = por %p64, %p65
      %p68 = scmp.ne.s32.totalorder %s51, %s67
      %p69 = scmp.eq.s32.totalorder %s24, 0
      %p70 = por %p68, %p69
      %s72 = sadd.s32 %s71, 1
      %p75 = scmp.eq.s32.totalorder %s18, 1
      %p76 = scmp.ne.s32.totalorder %s71, %s73
      %p77 = scmp.eq.s32.totalorder %s18, 0
      %p78 = por %p76, %p77
      %p79 = scmp.ne.s32.totalorder %s71, %s73
      %p80 = scmp.eq.s32.totalorder %s23, 1
      %p81 = por %p79, %p80
      %p82 = scmp.ne.s32.totalorder %s73, %s74
      %p83 = scmp.eq.s32.totalorder %s23, 0
      %p84 = por %p82, %p83
      %p85 = scmp.ne.s32.totalorder %s73, %s74
      %p86 = scmp.eq.s32.totalorder %s24, 1
      %p87 = por %p85, %p86
      %p89 = scmp.ne.s32.totalorder %s74, %s88
      %p90 = scmp.eq.s32.totalorder %s24, 0
      %p91 = por %p89, %p90
      %s92 = ssub.s32 %s27, %s36
      %p93 = scmp.eq.s32.totalorder %s92, 0
      %s95 = sadd.s32 %s94, 1
      %s96 = scalar_select %p93, %s94, %s95
      %p99 = pneg %p93
      %p100 = scmp.eq.s32.totalorder %s18, 1
      %p101 = por %p99, %p100
      %p102 = scmp.ne.s32.totalorder %s94, %s97
      %p103 = scmp.eq.s32.totalorder %s18, 0
      %p104 = por %p102, %p103
      %p105 = scmp.ne.s32.totalorder %s94, %s97
      %p106 = scmp.eq.s32.totalorder %s23, 1
      %p107 = por %p105, %p106
      %p108 = scmp.ne.s32.totalorder %s97, %s98
      %p109 = scmp.eq.s32.totalorder %s23, 0
      %p110 = por %p108, %p109
      %p111 = scmp.ne.s32.totalorder %s97, %s98
      %p112 = scmp.eq.s32.totalorder %s24, 1
      %p113 = por %p111, %p112
      %p115 = scmp.ne.s32.totalorder %s98, %s114
      %p116 = scmp.eq.s32.totalorder %s24, 0
      %p117 = por %p115, %p116
      %s119 = sadd.s32 %s118, 1
      %p122 = scmp.eq.s32.totalorder %s18, 1
      %p123 = scmp.ne.s32.totalorder %s118, %s120
      %p124 = scmp.eq.s32.totalorder %s18, 0
      %p125 = por %p123, %p124
      %p126 = scmp.ne.s32.totalorder %s118, %s120
      %p127 = scmp.eq.s32.totalorder %s23, 1
      %p128 = por %p126, %p127
      %p129 = scmp.ne.s32.totalorder %s120, %s121
      %p130 = scmp.eq.s32.totalorder %s23, 0
      %p131 = por %p129, %p130
      %p132 = scmp.ne.s32.totalorder %s120, %s121
      %p133 = scmp.eq.s32.totalorder %s24, 1
      %p134 = por %p132, %p133
      %p136 = scmp.ne.s32.totalorder %s121, %s135
      %p137 = scmp.eq.s32.totalorder %s24, 0
      %p138 = por %p136, %p137
      %s140 = sadd.s32 %s139, 1
      %p143 = scmp.eq.s32.totalorder %s18, 1
      %p144 = scmp.ne.s32.totalorder %s139, %s141
      %p145 = scmp.eq.s32.totalorder %s18, 0
      %p146 = por %p144, %p145
      %p147 = scmp.ne.s32.totalorder %s139, %s141
      %p148 = scmp.eq.s32.totalorder %s23, 1
      %p149 = por %p147, %p148
      %p150 = scmp.ne.s32.totalorder %s141, %s142
      %p151 = scmp.eq.s32.totalorder %s23, 0
      %p152 = por %p150, %p151
      %p153 = scmp.ne.s32.totalorder %s141, %s142
      %p154 = scmp.eq.s32.totalorder %s24, 1
      %p155 = por %p153, %p154
      %p157 = scmp.ne.s32.totalorder %s142, %s156
      %p158 = scmp.eq.s32.totalorder %s24, 0
      %p159 = por %p157, %p158
      %s160 = ssub.s32 %s25, %s44
      %s161 = ssub.s32 %s26, %s40
      %s162 = sor.u32 %s160, %s161
      %p163 = scmp.eq.s32.totalorder %s162, 0
      %s165 = sadd.s32 %s164, 1
      %s166 = scalar_select %p163, %s164, %s165
      %p169 = pneg %p163
      %p170 = scmp.eq.s32.totalorder %s18, 1
      %p171 = por %p169, %p170
      %p172 = scmp.ne.s32.totalorder %s164, %s167
      %p173 = scmp.eq.s32.totalorder %s18, 0
      %p174 = por %p172, %p173
      %p175 = scmp.ne.s32.totalorder %s164, %s167
      %p176 = scmp.eq.s32.totalorder %s23, 1
      %p177 = por %p175, %p176
      %p178 = scmp.ne.s32.totalorder %s167, %s168
      %p179 = scmp.eq.s32.totalorder %s23, 0
      %p180 = por %p178, %p179
      %p181 = scmp.ne.s32.totalorder %s167, %s168
      %p182 = scmp.eq.s32.totalorder %s24, 1
      %p183 = por %p181, %p182
      %p185 = scmp.ne.s32.totalorder %s168, %s184
      %p186 = scmp.eq.s32.totalorder %s24, 0
      %p187 = por %p185, %p186
      %p188 = scmp.le.s32.totalorder 1, %s18
      %p189 = scmp.lt.s32.totalorder %s18, 3
      %p190 = pnand %p188, %p189
      %p191 = pneg %p190
      // Predicated region
      $region9: #{tpu_custom_call.1} parent=5 // pred_check
        _
      $region10: #{tpu_custom_call.1} parent=5 // pred_check_branch
        %193 = sbr.rel (%p190) target = $region12
      $region11: #{tpu_custom_call.1} parent=5 // pred_region
        %s194 = ssub.s32 %s18, 1
        // Predicated region
        $region13: #{tpu_custom_call.1} parent=11 // pred_check
          %p195 = pneg %p84
        $region14: #{tpu_custom_call.1} parent=11 // pred_check_branch
          %197 = sbr.rel (%p195) target = $region16
        $region15: #{tpu_custom_call.1} parent=11 // pred_region
          %s199 = ssub.s32 256, 256
          %200 = vsyncadd [#allocation7], %s199
          %s201 = sshll.u32 [#allocation6], 4
          %s202 = int_to_ptr.vmem [resolvable:$true] %s201
          %207 = dma.hbm_to_vmem [thread:$0]  %s1, 256, %s202, [#allocation7], 64, 64, 4
        $region16: #{tpu_custom_call.1} parent=11 // pred_fallthru
          _
        // Predicated region
        $region17: #{tpu_custom_call.1} parent=11 // pred_check
          %p208 = pneg %p110
        $region18: #{tpu_custom_call.1} parent=11 // pred_check_branch
          %210 = sbr.rel (%p208) target = $region20
        $region19: #{tpu_custom_call.1} parent=11 // pred_region
          %p211 = scmp.lt.s32.totalorder %s30, 0
          %s212 = scalar_select %p211, %s30, 0
          %s213 = scalar_lea.vmem %s2, %s212
        $region20: #{tpu_custom_call.1} parent=11 // pred_fallthru
          _
        // Predicated region
        $region21: #{tpu_custom_call.1} parent=11 // pred_check
          %p214 = pneg %p131
        $region22: #{tpu_custom_call.1} parent=11 // pred_check_branch
          %216 = sbr.rel (%p214) target = $region24
        $region23: #{tpu_custom_call.1} parent=11 // pred_region
          %s218 = ssub.s32 256, 256
          %219 = vsyncadd [#allocation7], %s218
          %s220 = sshll.u32 [#allocation8], 4
          %s221 = int_to_ptr.vmem [resolvable:$true] %s220
          %226 = dma.hbm_to_vmem [thread:$0]  %s3, 256, %s221, [#allocation7], 64, 64, 4
        $region24: #{tpu_custom_call.1} parent=11 // pred_fallthru
          _
        // Predicated region
        $region25: #{tpu_custom_call.1} parent=11 // pred_check
          %p227 = pneg %p152
        $region26: #{tpu_custom_call.1} parent=11 // pred_check_branch
          %229 = sbr.rel (%p227) target = $region28
        $region27: #{tpu_custom_call.1} parent=11 // pred_region
          _
        $region28: #{tpu_custom_call.1} parent=11 // pred_fallthru
          _
      $region12: #{tpu_custom_call.1} parent=5 // pred_fallthru
        _
      %p230 = scmp.lt.s32.totalorder %s18, 2
      // Predicated region
      $region29: #{tpu_custom_call.1} parent=5 // pred_check
        %p231 = pneg %p230
      $region30: #{tpu_custom_call.1} parent=5 // pred_check_branch
        %233 = sbr.rel (%p231) target = $region32
      $region31: #{tpu_custom_call.1} parent=5 // pred_region
        // Predicated region
        $region33: #{tpu_custom_call.1} parent=31 // pred_check
          %p234 = pneg %p57
        $region34: #{tpu_custom_call.1} parent=31 // pred_check_branch
          %236 = sbr.rel (%p234) target = $region36
        $region35: #{tpu_custom_call.1} parent=31 // pred_region
          %s237 = sand.u32 %s47, 1
          %s238 = scalar_lea.sflag [#allocation4], %s237
          %s239 = sand.u32 %s47, 1
          %s240 = smul.addr %s239, 4
          %s241 = scalar_lea.vmem [#allocation3], %s240
          %s243 = ssub.s32 64, 64
          %244 = vsyncadd %s238, %s243
          %s245 = smul.addr %s25, 64
          %s246 = scalar_lea.hbm %s0, %s245
          %s248 = sshll.u32 %s241, 4
          %s249 = int_to_ptr.vmem [resolvable:$true] %s248
          %251 = dma.hbm_to_vmem [thread:$0]  %s246, 64, %s249, %s238
        $region36: #{tpu_custom_call.1} parent=31 // pred_fallthru
          _
      $region32: #{tpu_custom_call.1} parent=5 // pred_fallthru
        _
      %p252 = scmp.le.s32.totalorder 1, %s18
      %p253 = scmp.lt.s32.totalorder %s18, 3
      %p254 = pnand %p252, %p253
      %p255 = pneg %p254
      // Predicated region
      $region37: #{tpu_custom_call.1} parent=5 // pred_check
        _
      $region38: #{tpu_custom_call.1} parent=5 // pred_check_branch
        %257 = sbr.rel (%p254) target = $region40
      $region39: #{tpu_custom_call.1} parent=5 // pred_region
        %s258 = ssub.s32 %s18, 1
        %s259 = sand.u32 %s50, 1
        %s260 = scalar_lea.sflag [#allocation4], %s259
        %s261 = sand.u32 %s50, 1
        %s262 = smul.addr %s261, 4
        %s263 = scalar_lea.vmem [#allocation3], %s262
        // Predicated region
        $region41: #{tpu_custom_call.1} parent=39 // pred_check
          %p264 = pneg %p63
        $region42: #{tpu_custom_call.1} parent=39 // pred_check_branch
          %266 = sbr.rel (%p264) target = $region44
        $region43: #{tpu_custom_call.1} parent=39 // pred_region
          %267 = dma.done %s260, 64
        $region44: #{tpu_custom_call.1} parent=39 // pred_fallthru
          _
        // Predicated region
        $region45: #{tpu_custom_call.1} parent=39 // pred_check
          %p268 = pneg %p84
        $region46: #{tpu_custom_call.1} parent=39 // pred_check_branch
          %270 = sbr.rel (%p268) target = $region48
        $region47: #{tpu_custom_call.1} parent=39 // pred_region
          %271 = dma.done [#allocation7], 256
        $region48: #{tpu_custom_call.1} parent=39 // pred_fallthru
          _
        // Predicated region
        $region49: #{tpu_custom_call.1} parent=39 // pred_check
          %p272 = pneg %p131
        $region50: #{tpu_custom_call.1} parent=39 // pred_check_branch
          %274 = sbr.rel (%p272) target = $region52
        $region51: #{tpu_custom_call.1} parent=39 // pred_region
          %275 = dma.done [#allocation7], 256
        $region52: #{tpu_custom_call.1} parent=39 // pred_fallthru
          _
        %s276 = sand.u32 %s50, 1
        %s277 = scalar_lea.sflag [#allocation4], %s276
        %s278 = sand.u32 %s50, 1
        %s279 = smul.addr %s278, 4
        %s280 = scalar_lea.vmem [#allocation3], %s279
        %p281 = pneg %p63
        %p282 = pneg %p60
        %p283 = pneg %p84
        %p284 = pneg %p81
        %p285 = scmp.lt.s32.totalorder %s30, 0
        %s286 = scalar_select %p285, %s30, 0
        %s287 = scalar_lea.vmem %s2, %s286
        %p288 = pneg %p110
        %p289 = pneg %p107
        %p290 = pneg %p131
        %p291 = pneg %p128
        %p292 = pneg %p152
        %p293 = pneg %p149
        %p294 = pneg %p180
        %p295 = pneg %p177
        %s296 = sand.u32 %s167, 1
        %s297 = scalar_lea.sflag [#allocation5], %s296
        %s298 = sand.u32 %s167, 1
        %s299 = smul.addr %s298, 8
        %s300 = scalar_lea.vmem [#allocation9], %s299
        %p301 = scmp.lt.s32.totalorder %s30, 0
        %s302 = scalar_select %p301, %s30, 0
        %s303 = scalar_lea.vmem %s2, %s302
        %v305 = vld [vmem:[%s263] sm:$0xf]
        %v306 = vld [vmem:[#allocation6] sm:$0xf]
        %v307 = vld [vmem:[#allocation6 + $0x4] sm:$0xf]
        %v308 = vld [vmem:[#allocation6 + $0x8] sm:$0xf]
        %v309 = vld [vmem:[#allocation6 + $0xc] sm:$0xf]
        %v310 = vld [vmem:[%s303] sm:$0x1]
        %v312 = vlaneseq
        %v313 = vshrl.u32 %v312, 7
        %v314 = vsub.s32 0, %v313
        %v315 = vrot.slane %v310, %v314
        %v321 = vunpack.c.l.b16 %v306
        %v322 = vunpack.c.l.b16 %v307
        %v323 = vunpack.c.l.b16 %v308
        %v324 = vunpack.c.l.b16 %v309
        %v325 = vpack.c.b16 %v322, %v321
        %v326 = vpack.c.b16 %v324, %v323
        %vm329 = vcmask 261120
        %v331 = vsel %vm329, %v305, 0
        %333 = vmatprep.subr.bf16.mxu0 0
        %334 = vmatpush1.bf16.msra.mxu0 %v325
        %335 = vmatprep.subr.bf16.mxu0 0
        %336 = vmatpush1.bf16.msra.mxu0 %v326
        %337 = vmatprep.subr.bf16.mxu0 0
        %338 = vmatpush1.bf16.msra.mxu0 0
        %339 = vmatprep.subr.bf16.mxu0 0
        %340 = vmatpush1.bf16.msra.mxu0 0
        %341 = vmatprep.subr.bf16.mxu0 0
        %342 = vmatpush1.bf16.msra.mxu0 0
        %343 = vmatprep.subr.bf16.mxu0 0
        %344 = vmatpush1.bf16.msra.mxu0 0
        %345 = vmatprep.subr.bf16.mxu0 0
        %346 = vmatpush1.bf16.msra.mxu0 0
        %347 = vmatprep.subr.bf16.mxu0 0
        %348 = vmatpush1.bf16.msra.mxu0 0
        %349 = vmatprep.subr.bf16.mxu0 0
        %350 = vmatpush1.bf16.msra.mxu0 0
        %351 = vmatprep.subr.bf16.mxu0 0
        %352 = vmatpush1.bf16.msra.mxu0 0
        %353 = vmatprep.subr.bf16.mxu0 0
        %354 = vmatpush1.bf16.msra.mxu0 0
        %355 = vmatprep.subr.bf16.mxu0 0
        %356 = vmatpush1.bf16.msra.mxu0 0
        %357 = vmatprep.subr.bf16.mxu0 0
        %358 = vmatpush1.bf16.msra.mxu0 0
        %359 = vmatprep.subr.bf16.mxu0 0
        %360 = vmatpush1.bf16.msra.mxu0 0
        %361 = vmatprep.subr.bf16.mxu0 0
        %362 = vmatpush1.bf16.msra.mxu0 0
        %363 = vmatprep.subr.bf16.mxu0 0
        %364 = vmatpush1.bf16.msra.mxu0 0
        %365 = vmatprep.mubr.bf16.mxu0 0
        %366 = vmatmul.mubr.bf16.gmra.mrb[0].mxu0 %v331
        %v367 = vpop.f32.mrb[0].mxu0
        %v368 = vadd.f32 %v315, %v367
        %v369 = vpop.f32.mrb[0].mxu0
        %v370 = vpop.f32.mrb[0].mxu0
        %v371 = vpop.f32.mrb[0].mxu0
        %372 = vdwg.mxu0
        %v373 = vpack.c.bf16 %v368, %v368
        %375 = vrot.lane.b32.xlu0 %v373, 120
        %v376 = vpop.permute.xlu0 %375
        %377 = vrot.lane.b32.xlu0 %v373, 112
        %v378 = vpop.permute.xlu0 %377
        %379 = vrot.lane.b32.xlu0 %v373, 104
        %v380 = vpop.permute.xlu0 %379
        %v382 = vunpack.c.l.s4 1983009808
        %v383 = vunpack.c.0.s8 %v382
        %v384 = vlaneseq
        %v385 = vshrl.u32 %v384, 7
        %v386 = vsub.s32 %v383, %v385
        %v387 = vrot.slane %v373, %v386
        %v390 = vunpack.c.l.s4 1983009808
        %v391 = vunpack.c.0.s8 %v390
        %v392 = vlaneseq
        %v393 = vshrl.u32 %v392, 7
        %v394 = vsub.s32 %v391, %v393
        %v395 = vrot.slane %v378, %v394
        %v396 = vcombine.low %v387, %v395
        %v397 = vcombine.high %v387, %v395
        %v399 = vunpack.c.l.s4 1934713408
        %v400 = vunpack.c.0.s8 %v399
        %v401 = vlaneseq
        %v402 = vshrl.u32 %v401, 7
        %v403 = vsub.s32 %v400, %v402
        %v404 = vrot.slane %v396, %v403
        %v406 = vunpack.c.l.s4 1934713408
        %v407 = vunpack.c.0.s8 %v406
        %v408 = vlaneseq
        %v409 = vshrl.u32 %v408, 7
        %v410 = vsub.s32 %v407, %v409
        %v411 = vrot.slane %v397, %v410
        %v412 = vcombine.high %v404, 0
        %v413 = vcombine.high %v411, 0
        %v416 = vunpack.c.l.s4 1983009808
        %v417 = vunpack.c.0.s8 %v416
        %v418 = vlaneseq
        %v419 = vshrl.u32 %v418, 7
        %v420 = vsub.s32 %v417, %v419
        %v421 = vrot.slane %v376, %v420
        %v424 = vunpack.c.l.s4 1983009808
        %v425 = vunpack.c.0.s8 %v424
        %v426 = vlaneseq
        %v427 = vshrl.u32 %v426, 7
        %v428 = vsub.s32 %v425, %v427
        %v429 = vrot.slane %v380, %v428
        %v430 = vcombine.low %v421, %v429
        %v431 = vcombine.high %v421, %v429
        %v433 = vunpack.c.l.s4 1934713408
        %v434 = vunpack.c.0.s8 %v433
        %v435 = vlaneseq
        %v436 = vshrl.u32 %v435, 7
        %v437 = vsub.s32 %v434, %v436
        %v438 = vrot.slane %v430, %v437
        %v440 = vunpack.c.l.s4 1934713408
        %v441 = vunpack.c.0.s8 %v440
        %v442 = vlaneseq
        %v443 = vshrl.u32 %v442, 7
        %v444 = vsub.s32 %v441, %v443
        %v445 = vrot.slane %v431, %v444
        %v446 = vcombine.high %v438, 0
        %v447 = vcombine.high %v445, 0
        %v450 = vpack.i.b16 %v438, %v404
        %v452 = vshrl.u32 %v404, 16
        %v453 = vshrl.u32 %v438, 16
        %v454 = vpack.i.b16 %v453, %v452
        %v458 = vpack.i.b16 %v446, %v412
        %v460 = vshrl.u32 %v412, 16
        %v461 = vshrl.u32 %v446, 16
        %v462 = vpack.i.b16 %v461, %v460
        %v466 = vpack.i.b16 %v445, %v411
        %v468 = vshrl.u32 %v411, 16
        %v469 = vshrl.u32 %v445, 16
        %v470 = vpack.i.b16 %v469, %v468
        %v474 = vpack.i.b16 %v447, %v413
        %v476 = vshrl.u32 %v413, 16
        %v477 = vshrl.u32 %v447, 16
        %v478 = vpack.i.b16 %v477, %v476
        %v480 = vcombine.low %v450, %v466
        %v482 = vunpack.c.l.s4 1983009808
        %v483 = vunpack.c.0.s8 %v482
        %v484 = vlaneseq
        %v485 = vshrl.u32 %v484, 7
        %v486 = vsub.s32 %v483, %v485
        %v487 = vrot.slane %v480, %v486
        %v488 = vcombine.low %v458, %v474
        %v490 = vunpack.c.l.s4 1983009808
        %v491 = vunpack.c.0.s8 %v490
        %v492 = vlaneseq
        %v493 = vshrl.u32 %v492, 7
        %v494 = vsub.s32 %v491, %v493
        %v495 = vrot.slane %v488, %v494
        %v496 = vcombine.low %v487, %v495
        %v498 = vunpack.c.l.s4 1934713408
        %v499 = vunpack.c.0.s8 %v498
        %v500 = vlaneseq
        %v501 = vshrl.u32 %v500, 7
        %v502 = vsub.s32 %v499, %v501
        %v503 = vrot.slane %v496, %v502
        %v504 = vcombine.high %v503, 0
        %v505 = vcombine.low %v454, %v470
        %v507 = vunpack.c.l.s4 1983009808
        %v508 = vunpack.c.0.s8 %v507
        %v509 = vlaneseq
        %v510 = vshrl.u32 %v509, 7
        %v511 = vsub.s32 %v508, %v510
        %v512 = vrot.slane %v505, %v511
        %v513 = vcombine.low %v462, %v478
        %v515 = vunpack.c.l.s4 1983009808
        %v516 = vunpack.c.0.s8 %v515
        %v517 = vlaneseq
        %v518 = vshrl.u32 %v517, 7
        %v519 = vsub.s32 %v516, %v518
        %v520 = vrot.slane %v513, %v519
        %v521 = vcombine.low %v512, %v520
        %v523 = vunpack.c.l.s4 1934713408
        %v524 = vunpack.c.0.s8 %v523
        %v525 = vlaneseq
        %v526 = vshrl.u32 %v525, 7
        %v527 = vsub.s32 %v524, %v526
        %v528 = vrot.slane %v521, %v527
        %v529 = vcombine.high %v528, 0
        %v532 = vpack.i.b16 %v528, %v503
        %v533 = vshrl.u32 %v503, 16
        %v534 = vshrl.u32 %v528, 16
        %v535 = vpack.i.b16 %v534, %v533
        %v538 = vpack.i.b16 %v529, %v504
        %v539 = vshrl.u32 %v504, 16
        %v540 = vshrl.u32 %v529, 16
        %v541 = vpack.i.b16 %v540, %v539
        %542 = vrot.lane.b32.xlu0 %v373, 96
        %v543 = vpop.permute.xlu0 %542
        %544 = vrot.lane.b32.xlu0 %v376, 96
        %v545 = vpop.permute.xlu0 %544
        %546 = vrot.lane.b32.xlu0 %v378, 96
        %v547 = vpop.permute.xlu0 %546
        %548 = vrot.lane.b32.xlu0 %v380, 96
        %v549 = vpop.permute.xlu0 %548
        %v552 = vunpack.c.l.s4 1983009808
        %v553 = vunpack.c.0.s8 %v552
        %v554 = vlaneseq
        %v555 = vshrl.u32 %v554, 7
        %v556 = vsub.s32 %v553, %v555
        %v557 = vrot.slane %v543, %v556
        %v560 = vunpack.c.l.s4 1983009808
        %v561 = vunpack.c.0.s8 %v560
        %v562 = vlaneseq
        %v563 = vshrl.u32 %v562, 7
        %v564 = vsub.s32 %v561, %v563
        %v565 = vrot.slane %v547, %v564
        %v566 = vcombine.low %v557, %v565
        %v567 = vcombine.high %v557, %v565
        %v569 = vunpack.c.l.s4 1934713408
        %v570 = vunpack.c.0.s8 %v569
        %v571 = vlaneseq
        %v572 = vshrl.u32 %v571, 7
        %v573 = vsub.s32 %v570, %v572
        %v574 = vrot.slane %v566, %v573
        %v576 = vunpack.c.l.s4 1934713408
        %v577 = vunpack.c.0.s8 %v576
        %v578 = vlaneseq
        %v579 = vshrl.u32 %v578, 7
        %v580 = vsub.s32 %v577, %v579
        %v581 = vrot.slane %v567, %v580
        %v582 = vcombine.high %v574, 0
        %v583 = vcombine.high %v581, 0
        %v586 = vunpack.c.l.s4 1983009808
        %v587 = vunpack.c.0.s8 %v586
        %v588 = vlaneseq
        %v589 = vshrl.u32 %v588, 7
        %v590 = vsub.s32 %v587, %v589
        %v591 = vrot.slane %v545, %v590
        %v594 = vunpack.c.l.s4 1983009808
        %v595 = vunpack.c.0.s8 %v594
        %v596 = vlaneseq
        %v597 = vshrl.u32 %v596, 7
        %v598 = vsub.s32 %v595, %v597
        %v599 = vrot.slane %v549, %v598
        %v600 = vcombine.low %v591, %v599
        %v601 = vcombine.high %v591, %v599
        %v603 = vunpack.c.l.s4 1934713408
        %v604 = vunpack.c.0.s8 %v603
        %v605 = vlaneseq
        %v606 = vshrl.u32 %v605, 7
        %v607 = vsub.s32 %v604, %v606
        %v608 = vrot.slane %v600, %v607
        %v610 = vunpack.c.l.s4 1934713408
        %v611 = vunpack.c.0.s8 %v610
        %v612 = vlaneseq
        %v613 = vshrl.u32 %v612, 7
        %v614 = vsub.s32 %v611, %v613
        %v615 = vrot.slane %v601, %v614
        %v616 = vcombine.high %v608, 0
        %v617 = vcombine.high %v615, 0
        %v620 = vpack.i.b16 %v608, %v574
        %v622 = vshrl.u32 %v574, 16
        %v623 = vshrl.u32 %v608, 16
        %v624 = vpack.i.b16 %v623, %v622
        %v628 = vpack.i.b16 %v616, %v582
        %v630 = vshrl.u32 %v582, 16
        %v631 = vshrl.u32 %v616, 16
        %v632 = vpack.i.b16 %v631, %v630
        %v636 = vpack.i.b16 %v615, %v581
        %v638 = vshrl.u32 %v581, 16
        %v639 = vshrl.u32 %v615, 16
        %v640 = vpack.i.b16 %v639, %v638
        %v644 = vpack.i.b16 %v617, %v583
        %v646 = vshrl.u32 %v583, 16
        %v647 = vshrl.u32 %v617, 16
        %v648 = vpack.i.b16 %v647, %v646
        %v650 = vcombine.low %v620, %v636
        %v652 = vunpack.c.l.s4 1983009808
        %v653 = vunpack.c.0.s8 %v652
        %v654 = vlaneseq
        %v655 = vshrl.u32 %v654, 7
        %v656 = vsub.s32 %v653, %v655
        %v657 = vrot.slane %v650, %v656
        %v658 = vcombine.low %v628, %v644
        %v660 = vunpack.c.l.s4 1983009808
        %v661 = vunpack.c.0.s8 %v660
        %v662 = vlaneseq
        %v663 = vshrl.u32 %v662, 7
        %v664 = vsub.s32 %v661, %v663
        %v665 = vrot.slane %v658, %v664
        %v666 = vcombine.low %v657, %v665
        %v668 = vunpack.c.l.s4 1934713408
        %v669 = vunpack.c.0.s8 %v668
        %v670 = vlaneseq
        %v671 = vshrl.u32 %v670, 7
        %v672 = vsub.s32 %v669, %v671
        %v673 = vrot.slane %v666, %v672
        %v674 = vcombine.high %v673, 0
        %v675 = vcombine.low %v624, %v640
        %v677 = vunpack.c.l.s4 1983009808
        %v678 = vunpack.c.0.s8 %v677
        %v679 = vlaneseq
        %v680 = vshrl.u32 %v679, 7
        %v681 = vsub.s32 %v678, %v680
        %v682 = vrot.slane %v675, %v681
        %v683 = vcombine.low %v632, %v648
        %v685 = vunpack.c.l.s4 1983009808
        %v686 = vunpack.c.0.s8 %v685
        %v687 = vlaneseq
        %v688 = vshrl.u32 %v687, 7
        %v689 = vsub.s32 %v686, %v688
        %v690 = vrot.slane %v683, %v689
        %v691 = vcombine.low %v682, %v690
        %v693 = vunpack.c.l.s4 1934713408
        %v694 = vunpack.c.0.s8 %v693
        %v695 = vlaneseq
        %v696 = vshrl.u32 %v695, 7
        %v697 = vsub.s32 %v694, %v696
        %v698 = vrot.slane %v691, %v697
        %v699 = vcombine.high %v698, 0
        %v702 = vpack.i.b16 %v698, %v673
        %v703 = vshrl.u32 %v673, 16
        %v704 = vshrl.u32 %v698, 16
        %v705 = vpack.i.b16 %v704, %v703
        %v708 = vpack.i.b16 %v699, %v674
        %v709 = vshrl.u32 %v674, 16
        %v710 = vshrl.u32 %v699, 16
        %v711 = vpack.i.b16 %v710, %v709
        %712 = vrot.lane.b32.xlu0 %v373, 64
        %v713 = vpop.permute.xlu0 %712
        %714 = vrot.lane.b32.xlu0 %v376, 64
        %v715 = vpop.permute.xlu0 %714
        %716 = vrot.lane.b32.xlu0 %v378, 64
        %v717 = vpop.permute.xlu0 %716
        %718 = vrot.lane.b32.xlu0 %v380, 64
        %v719 = vpop.permute.xlu0 %718
        %v722 = vunpack.c.l.s4 1983009808
        %v723 = vunpack.c.0.s8 %v722
        %v724 = vlaneseq
        %v725 = vshrl.u32 %v724, 7
        %v726 = vsub.s32 %v723, %v725
        %v727 = vrot.slane %v713, %v726
        %v730 = vunpack.c.l.s4 1983009808
        %v731 = vunpack.c.0.s8 %v730
        %v732 = vlaneseq
        %v733 = vshrl.u32 %v732, 7
        %v734 = vsub.s32 %v731, %v733
        %v735 = vrot.slane %v717, %v734
        %v736 = vcombine.low %v727, %v735
        %v737 = vcombine.high %v727, %v735
        %v739 = vunpack.c.l.s4 1934713408
        %v740 = vunpack.c.0.s8 %v739
        %v741 = vlaneseq
        %v742 = vshrl.u32 %v741, 7
        %v743 = vsub.s32 %v740, %v742
        %v744 = vrot.slane %v736, %v743
        %v746 = vunpack.c.l.s4 1934713408
        %v747 = vunpack.c.0.s8 %v746
        %v748 = vlaneseq
        %v749 = vshrl.u32 %v748, 7
        %v750 = vsub.s32 %v747, %v749
        %v751 = vrot.slane %v737, %v750
        %v752 = vcombine.high %v744, 0
        %v753 = vcombine.high %v751, 0
        %v756 = vunpack.c.l.s4 1983009808
        %v757 = vunpack.c.0.s8 %v756
        %v758 = vlaneseq
        %v759 = vshrl.u32 %v758, 7
        %v760 = vsub.s32 %v757, %v759
        %v761 = vrot.slane %v715, %v760
        %v764 = vunpack.c.l.s4 1983009808
        %v765 = vunpack.c.0.s8 %v764
        %v766 = vlaneseq
        %v767 = vshrl.u32 %v766, 7
        %v768 = vsub.s32 %v765, %v767
        %v769 = vrot.slane %v719, %v768
        %v770 = vcombine.low %v761, %v769
        %v771 = vcombine.high %v761, %v769
        %v773 = vunpack.c.l.s4 1934713408
        %v774 = vunpack.c.0.s8 %v773
        %v775 = vlaneseq
        %v776 = vshrl.u32 %v775, 7
        %v777 = vsub.s32 %v774, %v776
        %v778 = vrot.slane %v770, %v777
        %v780 = vunpack.c.l.s4 1934713408
        %v781 = vunpack.c.0.s8 %v780
        %v782 = vlaneseq
        %v783 = vshrl.u32 %v782, 7
        %v784 = vsub.s32 %v781, %v783
        %v785 = vrot.slane %v771, %v784
        %v786 = vcombine.high %v778, 0
        %v787 = vcombine.high %v785, 0
        %v790 = vpack.i.b16 %v778, %v744
        %v792 = vshrl.u32 %v744, 16
        %v793 = vshrl.u32 %v778, 16
        %v794 = vpack.i.b16 %v793, %v792
        %v798 = vpack.i.b16 %v786, %v752
        %v800 = vshrl.u32 %v752, 16
        %v801 = vshrl.u32 %v786, 16
        %v802 = vpack.i.b16 %v801, %v800
        %v806 = vpack.i.b16 %v785, %v751
        %v808 = vshrl.u32 %v751, 16
        %v809 = vshrl.u32 %v785, 16
        %v810 = vpack.i.b16 %v809, %v808
        %v814 = vpack.i.b16 %v787, %v753
        %v816 = vshrl.u32 %v753, 16
        %v817 = vshrl.u32 %v787, 16
        %v818 = vpack.i.b16 %v817, %v816
        %v820 = vcombine.low %v790, %v806
        %v822 = vunpack.c.l.s4 1983009808
        %v823 = vunpack.c.0.s8 %v822
        %v824 = vlaneseq
        %v825 = vshrl.u32 %v824, 7
        %v826 = vsub.s32 %v823, %v825
        %v827 = vrot.slane %v820, %v826
        %v828 = vcombine.low %v798, %v814
        %v830 = vunpack.c.l.s4 1983009808
        %v831 = vunpack.c.0.s8 %v830
        %v832 = vlaneseq
        %v833 = vshrl.u32 %v832, 7
        %v834 = vsub.s32 %v831, %v833
        %v835 = vrot.slane %v828, %v834
        %v836 = vcombine.low %v827, %v835
        %v838 = vunpack.c.l.s4 1934713408
        %v839 = vunpack.c.0.s8 %v838
        %v840 = vlaneseq
        %v841 = vshrl.u32 %v840, 7
        %v842 = vsub.s32 %v839, %v841
        %v843 = vrot.slane %v836, %v842
        %v844 = vcombine.high %v843, 0
        %v845 = vcombine.low %v794, %v810
        %v847 = vunpack.c.l.s4 1983009808
        %v848 = vunpack.c.0.s8 %v847
        %v849 = vlaneseq
        %v850 = vshrl.u32 %v849, 7
        %v851 = vsub.s32 %v848, %v850
        %v852 = vrot.slane %v845, %v851
        %v853 = vcombine.low %v802, %v818
        %v855 = vunpack.c.l.s4 1983009808
        %v856 = vunpack.c.0.s8 %v855
        %v857 = vlaneseq
        %v858 = vshrl.u32 %v857, 7
        %v859 = vsub.s32 %v856, %v858
        %v860 = vrot.slane %v853, %v859
        %v861 = vcombine.low %v852, %v860
        %v863 = vunpack.c.l.s4 1934713408
        %v864 = vunpack.c.0.s8 %v863
        %v865 = vlaneseq
        %v866 = vshrl.u32 %v865, 7
        %v867 = vsub.s32 %v864, %v866
        %v868 = vrot.slane %v861, %v867
        %v869 = vcombine.high %v868, 0
        %v872 = vpack.i.b16 %v868, %v843
        %v873 = vshrl.u32 %v843, 16
        %v874 = vshrl.u32 %v868, 16
        %v875 = vpack.i.b16 %v874, %v873
        %v878 = vpack.i.b16 %v869, %v844
        %v879 = vshrl.u32 %v844, 16
        %v880 = vshrl.u32 %v869, 16
        %v881 = vpack.i.b16 %v880, %v879
        %vm882 = vcmask 64512
        %v884 = vsel %vm882, %v532, 0
        %v887 = vsel %vm882, %v702, 0
        %889 = vmatprep.subr.bf16.mxu0 0
        %890 = vmatpush1.bf16.xpose.msra.mxu0 %v887
        %891 = vmatprep.subr.bf16.mxu0 0
        %892 = vmatpush1.bf16.xpose.msra.mxu0 0
        %893 = vmatprep.subr.bf16.mxu0 0
        %894 = vmatpush1.bf16.xpose.msra.mxu0 0
        %895 = vmatprep.subr.bf16.mxu0 0
        %896 = vmatpush1.bf16.xpose.msra.mxu0 0
        %897 = vmatprep.subr.bf16.mxu0 0
        %898 = vmatpush1.bf16.xpose.msra.mxu0 0
        %899 = vmatprep.subr.bf16.mxu0 0
        %900 = vmatpush1.bf16.xpose.msra.mxu0 0
        %901 = vmatprep.subr.bf16.mxu0 0
        %902 = vmatpush1.bf16.xpose.msra.mxu0 0
        %903 = vmatprep.subr.bf16.mxu0 0
        %904 = vmatpush1.bf16.xpose.msra.mxu0 0
        %905 = vmatprep.subr.bf16.mxu0 0
        %906 = vmatpush1.bf16.xpose.msra.mxu0 0
        %907 = vmatprep.subr.bf16.mxu0 0
        %908 = vmatpush1.bf16.xpose.msra.mxu0 0
        %909 = vmatprep.subr.bf16.mxu0 0
        %910 = vmatpush1.bf16.xpose.msra.mxu0 0
        %911 = vmatprep.subr.bf16.mxu0 0
        %912 = vmatpush1.bf16.xpose.msra.mxu0 0
        %913 = vmatprep.subr.bf16.mxu0 0
        %914 = vmatpush1.bf16.xpose.msra.mxu0 0
        %915 = vmatprep.subr.bf16.mxu0 0
        %916 = vmatpush1.bf16.xpose.msra.mxu0 0
        %917 = vmatprep.subr.bf16.mxu0 0
        %918 = vmatpush1.bf16.xpose.msra.mxu0 0
        %919 = vmatprep.subr.bf16.mxu0 0
        %920 = vmatpush1.bf16.xpose.msra.mxu0 0
        %921 = vmatprep.mubr.bf16.mxu0 0
        %922 = vmatmul.mubr.bf16.gmra.mrb[0].mxu0 %v884
        %v923 = vpop.f32.mrb[0].mxu0
        %v924 = vadd.f32 0.0, %v923
        %v925 = vpop.f32.mrb[0].mxu0
        %v926 = vpop.f32.mrb[0].mxu0
        %v927 = vpop.f32.mrb[0].mxu0
        %928 = vdwg.mxu0
        %v930 = vsel %vm882, %v535, 0
        %v933 = vsel %vm882, %v705, 0
        %935 = vmatprep.subr.bf16.mxu0 0
        %936 = vmatpush1.bf16.xpose.msra.mxu0 %v933
        %937 = vmatprep.subr.bf16.mxu0 0
        %938 = vmatpush1.bf16.xpose.msra.mxu0 0
        %939 = vmatprep.subr.bf16.mxu0 0
        %940 = vmatpush1.bf16.xpose.msra.mxu0 0
        %941 = vmatprep.subr.bf16.mxu0 0
        %942 = vmatpush1.bf16.xpose.msra.mxu0 0
        %943 = vmatprep.subr.bf16.mxu0 0
        %944 = vmatpush1.bf16.xpose.msra.mxu0 0
        %945 = vmatprep.subr.bf16.mxu0 0
        %946 = vmatpush1.bf16.xpose.msra.mxu0 0
        %947 = vmatprep.subr.bf16.mxu0 0
        %948 = vmatpush1.bf16.xpose.msra.mxu0 0
        %949 = vmatprep.subr.bf16.mxu0 0
        %950 = vmatpush1.bf16.xpose.msra.mxu0 0
        %951 = vmatprep.subr.bf16.mxu0 0
        %952 = vmatpush1.bf16.xpose.msra.mxu0 0
        %953 = vmatprep.subr.bf16.mxu0 0
        %954 = vmatpush1.bf16.xpose.msra.mxu0 0
        %955 = vmatprep.subr.bf16.mxu0 0
        %956 = vmatpush1.bf16.xpose.msra.mxu0 0
        %957 = vmatprep.subr.bf16.mxu0 0
        %958 = vmatpush1.bf16.xpose.msra.mxu0 0
        %959 = vmatprep.subr.bf16.mxu0 0
        %960 = vmatpush1.bf16.xpose.msra.mxu0 0
        %961 = vmatprep.subr.bf16.mxu0 0
        %962 = vmatpush1.bf16.xpose.msra.mxu0 0
        %963 = vmatprep.subr.bf16.mxu0 0
        %964 = vmatpush1.bf16.xpose.msra.mxu0 0
        %965 = vmatprep.subr.bf16.mxu0 0
        %966 = vmatpush1.bf16.xpose.msra.mxu0 0
        %967 = vmatprep.mubr.bf16.mxu0 0
        %968 = vmatmul.mubr.bf16.gmra.mrb[0].mxu0 %v930
        %v969 = vpop.f32.mrb[0].mxu0
        %v970 = vadd.f32 0.0, %v969
        %v971 = vpop.f32.mrb[0].mxu0
        %v972 = vpop.f32.mrb[0].mxu0
        %v973 = vpop.f32.mrb[0].mxu0
        %974 = vdwg.mxu0
        %v976 = vsel %vm882, %v538, 0
        %v979 = vsel %vm882, %v708, 0
        %981 = vmatprep.subr.bf16.mxu0 0
        %982 = vmatpush1.bf16.xpose.msra.mxu0 %v979
        %983 = vmatprep.subr.bf16.mxu0 0
        %984 = vmatpush1.bf16.xpose.msra.mxu0 0
        %985 = vmatprep.subr.bf16.mxu0 0
        %986 = vmatpush1.bf16.xpose.msra.mxu0 0
        %987 = vmatprep.subr.bf16.mxu0 0
        %988 = vmatpush1.bf16.xpose.msra.mxu0 0
        %989 = vmatprep.subr.bf16.mxu0 0
        %990 = vmatpush1.bf16.xpose.msra.mxu0 0
        %991 = vmatprep.subr.bf16.mxu0 0
        %992 = vmatpush1.bf16.xpose.msra.mxu0 0
        %993 = vmatprep.subr.bf16.mxu0 0
        %994 = vmatpush1.bf16.xpose.msra.mxu0 0
        %995 = vmatprep.subr.bf16.mxu0 0
        %996 = vmatpush1.bf16.xpose.msra.mxu0 0
        %997 = vmatprep.subr.bf16.mxu0 0
        %998 = vmatpush1.bf16.xpose.msra.mxu0 0
        %999 = vmatprep.subr.bf16.mxu0 0
        %1000 = vmatpush1.bf16.xpose.msra.mxu0 0
        %1001 = vmatprep.subr.bf16.mxu0 0
        %1002 = vmatpush1.bf16.xpose.msra.mxu0 0
        %1003 = vmatprep.subr.bf16.mxu0 0
        %1004 = vmatpush1.bf16.xpose.msra.mxu0 0
        %1005 = vmatprep.subr.bf16.mxu0 0
        %1006 = vmatpush1.bf16.xpose.msra.mxu0 0
        %1007 = vmatprep.subr.bf16.mxu0 0
        %1008 = vmatpush1.bf16.xpose.msra.mxu0 0
        %1009 = vmatprep.subr.bf16.mxu0 0
        %1010 = vmatpush1.bf16.xpose.msra.mxu0 0
        %1011 = vmatprep.subr.bf16.mxu0 0
        %1012 = vmatpush1.bf16.xpose.msra.mxu0 0
        %1013 = vmatprep.mubr.bf16.mxu0 0
        %1014 = vmatmul.mubr.bf16.gmra.mrb[0].mxu0 %v976
        %v1015 = vpop.f32.mrb[0].mxu0
        %v1016 = vadd.f32 0.0, %v1015
        %v1017 = vpop.f32.mrb[0].mxu0
        %v1018 = vpop.f32.mrb[0].mxu0
        %v1019 = vpop.f32.mrb[0].mxu0
        %1020 = vdwg.mxu0
        %v1022 = vsel %vm882, %v541, 0
        %v1025 = vsel %vm882, %v711, 0
        %1027 = vmatprep.subr.bf16.mxu0 0
        %1028 = vmatpush1.bf16.xpose.msra.mxu0 %v1025
        %1029 = vmatprep.subr.bf16.mxu0 0
        %1030 = vmatpush1.bf16.xpose.msra.mxu0 0
        %1031 = vmatprep.subr.bf16.mxu0 0
        %1032 = vmatpush1.bf16.xpose.msra.mxu0 0
        %1033 = vmatprep.subr.bf16.mxu0 0
        %1034 = vmatpush1.bf16.xpose.msra.mxu0 0
        %1035 = vmatprep.subr.bf16.mxu0 0
        %1036 = vmatpush1.bf16.xpose.msra.mxu0 0
        %1037 = vmatprep.subr.bf16.mxu0 0
        %1038 = vmatpush1.bf16.xpose.msra.mxu0 0
        %1039 = vmatprep.subr.bf16.mxu0 0
        %1040 = vmatpush1.bf16.xpose.msra.mxu0 0
        %1041 = vmatprep.subr.bf16.mxu0 0
        %1042 = vmatpush1.bf16.xpose.msra.mxu0 0
        %1043 = vmatprep.subr.bf16.mxu0 0
        %1044 = vmatpush1.bf16.xpose.msra.mxu0 0
        %1045 = vmatprep.subr.bf16.mxu0 0
        %1046 = vmatpush1.bf16.xpose.msra.mxu0 0
        %1047 = vmatprep.subr.bf16.mxu0 0
        %1048 = vmatpush1.bf16.xpose.msra.mxu0 0
        %1049 = vmatprep.subr.bf16.mxu0 0
        %1050 = vmatpush1.bf16.xpose.msra.mxu0 0
        %1051 = vmatprep.subr.bf16.mxu0 0
        %1052 = vmatpush1.bf16.xpose.msra.mxu0 0
        %1053 = vmatprep.subr.bf16.mxu0 0
        %1054 = vmatpush1.bf16.xpose.msra.mxu0 0
        %1055 = vmatprep.subr.bf16.mxu0 0
        %1056 = vmatpush1.bf16.xpose.msra.mxu0 0
        %1057 = vmatprep.subr.bf16.mxu0 0
        %1058 = vmatpush1.bf16.xpose.msra.mxu0 0
        %1059 = vmatprep.mubr.bf16.mxu0 0
        %1060 = vmatmul.mubr.bf16.gmra.mrb[0].mxu0 %v1022
        %v1061 = vpop.f32.mrb[0].mxu0
        %v1062 = vadd.f32 0.0, %v1061
        %v1063 = vpop.f32.mrb[0].mxu0
        %v1064 = vpop.f32.mrb[0].mxu0
        %v1065 = vpop.f32.mrb[0].mxu0
        %1066 = vdwg.mxu0
        %v1067 = vsel %vm882, %v924, -inf
        %1068 = vmax.xlane.f32.xlu0 %v1067
        %v1069 = vpop.xlane.xlu0 %1068
        %v1070 = vsel %vm882, %v970, -inf
        %1071 = vmax.xlane.f32.xlu0 %v1070
        %v1072 = vpop.xlane.xlu0 %1071
        %v1073 = vsel %vm882, %v1016, -inf
        %1074 = vmax.xlane.f32.xlu0 %v1073
        %v1075 = vpop.xlane.xlu0 %1074
        %v1076 = vsel %vm882, %v1062, -inf
        %1077 = vmax.xlane.f32.xlu0 %v1076
        %v1078 = vpop.xlane.xlu0 %1077
        %v1079 = vsub.f32 %v924, %v1069
        %v1080 = vsub.f32 %v970, %v1072
        %v1081 = vsub.f32 %v1016, %v1075
        %v1082 = vsub.f32 %v1062, %v1078
        %v1083 = vmul.f32 %v1079, 1.442695
        %v1084 = vpow.pop %v1083
        %v1085 = vmul.f32 %v1080, 1.442695
        %v1086 = vpow.pop %v1085
        %v1087 = vmul.f32 %v1081, 1.442695
        %v1088 = vpow.pop %v1087
        %v1089 = vmul.f32 %v1082, 1.442695
        %v1090 = vpow.pop %v1089
        %v1091 = vsel %vm882, %v1084, 0.0
        %1092 = vadd.xlane.f32.xlu0 %v1091
        %v1093 = vpop.xlane.xlu0 %1092
        %v1094 = vsel %vm882, %v1086, 0.0
        %1095 = vadd.xlane.f32.xlu0 %v1094
        %v1096 = vpop.xlane.xlu0 %1095
        %v1097 = vsel %vm882, %v1088, 0.0
        %1098 = vadd.xlane.f32.xlu0 %v1097
        %v1099 = vpop.xlane.xlu0 %1098
        %v1100 = vsel %vm882, %v1090, 0.0
        %1101 = vadd.xlane.f32.xlu0 %v1100
        %v1102 = vpop.xlane.xlu0 %1101
        %v1103 = vrcp.pop %v1093
        %v1104 = vmul.f32 1.0, %v1103
        %v1105 = vrcp.pop %v1096
        %v1106 = vmul.f32 1.0, %v1105
        %v1107 = vrcp.pop %v1099
        %v1108 = vmul.f32 1.0, %v1107
        %v1109 = vrcp.pop %v1102
        %v1110 = vmul.f32 1.0, %v1109
        %v1111 = vmul.f32 %v1084, %v1104
        %v1112 = vmul.f32 %v1086, %v1106
        %v1113 = vmul.f32 %v1088, %v1108
        %v1114 = vmul.f32 %v1090, %v1110
        %v1115 = vpack.c.bf16 %v1111, %v1111
        %v1116 = vpack.c.bf16 %v1112, %v1112
        %v1117 = vpack.c.bf16 %v1113, %v1113
        %v1118 = vpack.c.bf16 %v1114, %v1114
        %v1120 = vsel %vm882, %v1115, 0
        %vm1122 = vcmask 1043456
        %v1124 = vsel %vm1122, %v872, 0
        %1126 = vmatprep.subr.bf16.mxu0 0
        %1127 = vmatpush1.bf16.msra.mxu0 %v1124
        %1128 = vmatprep.subr.bf16.mxu0 0
        %1129 = vmatpush1.bf16.msra.mxu0 0
        %1130 = vmatprep.subr.bf16.mxu0 0
        %1131 = vmatpush1.bf16.msra.mxu0 0
        %1132 = vmatprep.subr.bf16.mxu0 0
        %1133 = vmatpush1.bf16.msra.mxu0 0
        %1134 = vmatprep.subr.bf16.mxu0 0
        %1135 = vmatpush1.bf16.msra.mxu0 0
        %1136 = vmatprep.subr.bf16.mxu0 0
        %1137 = vmatpush1.bf16.msra.mxu0 0
        %1138 = vmatprep.subr.bf16.mxu0 0
        %1139 = vmatpush1.bf16.msra.mxu0 0
        %1140 = vmatprep.subr.bf16.mxu0 0
        %1141 = vmatpush1.bf16.msra.mxu0 0
        %1142 = vmatprep.subr.bf16.mxu0 0
        %1143 = vmatpush1.bf16.msra.mxu0 0
        %1144 = vmatprep.subr.bf16.mxu0 0
        %1145 = vmatpush1.bf16.msra.mxu0 0
        %1146 = vmatprep.subr.bf16.mxu0 0
        %1147 = vmatpush1.bf16.msra.mxu0 0
        %1148 = vmatprep.subr.bf16.mxu0 0
        %1149 = vmatpush1.bf16.msra.mxu0 0
        %1150 = vmatprep.subr.bf16.mxu0 0
        %1151 = vmatpush1.bf16.msra.mxu0 0
        %1152 = vmatprep.subr.bf16.mxu0 0
        %1153 = vmatpush1.bf16.msra.mxu0 0
        %1154 = vmatprep.subr.bf16.mxu0 0
        %1155 = vmatpush1.bf16.msra.mxu0 0
        %1156 = vmatprep.subr.bf16.mxu0 0
        %1157 = vmatpush1.bf16.msra.mxu0 0
        %1158 = vmatprep.mubr.bf16.mxu0 0
        %1159 = vmatmul.mubr.bf16.gmra.mrb[0].mxu0 %v1120
        %v1160 = vpop.f32.mrb[0].mxu0
        %v1161 = vadd.f32 0.0, %v1160
        %v1162 = vpop.f32.mrb[0].mxu0
        %v1163 = vpop.f32.mrb[0].mxu0
        %v1164 = vpop.f32.mrb[0].mxu0
        %1165 = vdwg.mxu0
        %v1167 = vsel %vm882, %v1116, 0
        %v1170 = vsel %vm1122, %v875, 0
        %1172 = vmatprep.subr.bf16.mxu0 0
        %1173 = vmatpush1.bf16.msra.mxu0 %v1170
        %1174 = vmatprep.subr.bf16.mxu0 0
        %1175 = vmatpush1.bf16.msra.mxu0 0
        %1176 = vmatprep.subr.bf16.mxu0 0
        %1177 = vmatpush1.bf16.msra.mxu0 0
        %1178 = vmatprep.subr.bf16.mxu0 0
        %1179 = vmatpush1.bf16.msra.mxu0 0
        %1180 = vmatprep.subr.bf16.mxu0 0
        %1181 = vmatpush1.bf16.msra.mxu0 0
        %1182 = vmatprep.subr.bf16.mxu0 0
        %1183 = vmatpush1.bf16.msra.mxu0 0
        %1184 = vmatprep.subr.bf16.mxu0 0
        %1185 = vmatpush1.bf16.msra.mxu0 0
        %1186 = vmatprep.subr.bf16.mxu0 0
        %1187 = vmatpush1.bf16.msra.mxu0 0
        %1188 = vmatprep.subr.bf16.mxu0 0
        %1189 = vmatpush1.bf16.msra.mxu0 0
        %1190 = vmatprep.subr.bf16.mxu0 0
        %1191 = vmatpush1.bf16.msra.mxu0 0
        %1192 = vmatprep.subr.bf16.mxu0 0
        %1193 = vmatpush1.bf16.msra.mxu0 0
        %1194 = vmatprep.subr.bf16.mxu0 0
        %1195 = vmatpush1.bf16.msra.mxu0 0
        %1196 = vmatprep.subr.bf16.mxu0 0
        %1197 = vmatpush1.bf16.msra.mxu0 0
        %1198 = vmatprep.subr.bf16.mxu0 0
        %1199 = vmatpush1.bf16.msra.mxu0 0
        %1200 = vmatprep.subr.bf16.mxu0 0
        %1201 = vmatpush1.bf16.msra.mxu0 0
        %1202 = vmatprep.subr.bf16.mxu0 0
        %1203 = vmatpush1.bf16.msra.mxu0 0
        %1204 = vmatprep.mubr.bf16.mxu0 0
        %1205 = vmatmul.mubr.bf16.gmra.mrb[0].mxu0 %v1167
        %v1206 = vpop.f32.mrb[0].mxu0
        %v1207 = vadd.f32 0.0, %v1206
        %v1208 = vpop.f32.mrb[0].mxu0
        %v1209 = vpop.f32.mrb[0].mxu0
        %v1210 = vpop.f32.mrb[0].mxu0
        %1211 = vdwg.mxu0
        %v1213 = vsel %vm882, %v1117, 0
        %v1216 = vsel %vm1122, %v878, 0
        %1218 = vmatprep.subr.bf16.mxu0 0
        %1219 = vmatpush1.bf16.msra.mxu0 %v1216
        %1220 = vmatprep.subr.bf16.mxu0 0
        %1221 = vmatpush1.bf16.msra.mxu0 0
        %1222 = vmatprep.subr.bf16.mxu0 0
        %1223 = vmatpush1.bf16.msra.mxu0 0
        %1224 = vmatprep.subr.bf16.mxu0 0
        %1225 = vmatpush1.bf16.msra.mxu0 0
        %1226 = vmatprep.subr.bf16.mxu0 0
        %1227 = vmatpush1.bf16.msra.mxu0 0
        %1228 = vmatprep.subr.bf16.mxu0 0
        %1229 = vmatpush1.bf16.msra.mxu0 0
        %1230 = vmatprep.subr.bf16.mxu0 0
        %1231 = vmatpush1.bf16.msra.mxu0 0
        %1232 = vmatprep.subr.bf16.mxu0 0
        %1233 = vmatpush1.bf16.msra.mxu0 0
        %1234 = vmatprep.subr.bf16.mxu0 0
        %1235 = vmatpush1.bf16.msra.mxu0 0
        %1236 = vmatprep.subr.bf16.mxu0 0
        %1237 = vmatpush1.bf16.msra.mxu0 0
        %1238 = vmatprep.subr.bf16.mxu0 0
        %1239 = vmatpush1.bf16.msra.mxu0 0
        %1240 = vmatprep.subr.bf16.mxu0 0
        %1241 = vmatpush1.bf16.msra.mxu0 0
        %1242 = vmatprep.subr.bf16.mxu0 0
        %1243 = vmatpush1.bf16.msra.mxu0 0
        %1244 = vmatprep.subr.bf16.mxu0 0
        %1245 = vmatpush1.bf16.msra.mxu0 0
        %1246 = vmatprep.subr.bf16.mxu0 0
        %1247 = vmatpush1.bf16.msra.mxu0 0
        %1248 = vmatprep.subr.bf16.mxu0 0
        %1249 = vmatpush1.bf16.msra.mxu0 0
        %1250 = vmatprep.mubr.bf16.mxu0 0
        %1251 = vmatmul.mubr.bf16.gmra.mrb[0].mxu0 %v1213
        %v1252 = vpop.f32.mrb[0].mxu0
        %v1253 = vadd.f32 0.0, %v1252
        %v1254 = vpop.f32.mrb[0].mxu0
        %v1255 = vpop.f32.mrb[0].mxu0
        %v1256 = vpop.f32.mrb[0].mxu0
        %1257 = vdwg.mxu0
        %v1259 = vsel %vm882, %v1118, 0
        %v1262 = vsel %vm1122, %v881, 0
        %1264 = vmatprep.subr.bf16.mxu0 0
        %1265 = vmatpush1.bf16.msra.mxu0 %v1262
        %1266 = vmatprep.subr.bf16.mxu0 0
        %1267 = vmatpush1.bf16.msra.mxu0 0
        %1268 = vmatprep.subr.bf16.mxu0 0
        %1269 = vmatpush1.bf16.msra.mxu0 0
        %1270 = vmatprep.subr.bf16.mxu0 0
        %1271 = vmatpush1.bf16.msra.mxu0 0
        %1272 = vmatprep.subr.bf16.mxu0 0
        %1273 = vmatpush1.bf16.msra.mxu0 0
        %1274 = vmatprep.subr.bf16.mxu0 0
        %1275 = vmatpush1.bf16.msra.mxu0 0
        %1276 = vmatprep.subr.bf16.mxu0 0
        %1277 = vmatpush1.bf16.msra.mxu0 0
        %1278 = vmatprep.subr.bf16.mxu0 0
        %1279 = vmatpush1.bf16.msra.mxu0 0
        %1280 = vmatprep.subr.bf16.mxu0 0
        %1281 = vmatpush1.bf16.msra.mxu0 0
        %1282 = vmatprep.subr.bf16.mxu0 0
        %1283 = vmatpush1.bf16.msra.mxu0 0
        %1284 = vmatprep.subr.bf16.mxu0 0
        %1285 = vmatpush1.bf16.msra.mxu0 0
        %1286 = vmatprep.subr.bf16.mxu0 0
        %1287 = vmatpush1.bf16.msra.mxu0 0
        %1288 = vmatprep.subr.bf16.mxu0 0
        %1289 = vmatpush1.bf16.msra.mxu0 0
        %1290 = vmatprep.subr.bf16.mxu0 0
        %1291 = vmatpush1.bf16.msra.mxu0 0
        %1292 = vmatprep.subr.bf16.mxu0 0
        %1293 = vmatpush1.bf16.msra.mxu0 0
        %1294 = vmatprep.subr.bf16.mxu0 0
        %1295 = vmatpush1.bf16.msra.mxu0 0
        %1296 = vmatprep.mubr.bf16.mxu0 0
        %1297 = vmatmul.mubr.bf16.gmra.mrb[0].mxu0 %v1259
        %v1298 = vpop.f32.mrb[0].mxu0
        %v1299 = vadd.f32 0.0, %v1298
        %v1300 = vpop.f32.mrb[0].mxu0
        %v1301 = vpop.f32.mrb[0].mxu0
        %v1302 = vpop.f32.mrb[0].mxu0
        %1303 = vdwg.mxu0
        %v1304 = vcombine.low %v1161, %v1253
        %v1305 = vcombine.high %v1161, %v1253
        %v1307 = vunpack.c.l.s4 1983009808
        %v1308 = vunpack.c.0.s8 %v1307
        %v1309 = vlaneseq
        %v1310 = vshrl.u32 %v1309, 7
        %v1311 = vsub.s32 %v1308, %v1310
        %v1312 = vrot.slane %v1304, %v1311
        %v1314 = vunpack.c.l.s4 1983009808
        %v1315 = vunpack.c.0.s8 %v1314
        %v1316 = vlaneseq
        %v1317 = vshrl.u32 %v1316, 7
        %v1318 = vsub.s32 %v1315, %v1317
        %v1319 = vrot.slane %v1305, %v1318
        %v1320 = vcombine.low %v1207, %v1299
        %v1321 = vcombine.high %v1207, %v1299
        %v1323 = vunpack.c.l.s4 1983009808
        %v1324 = vunpack.c.0.s8 %v1323
        %v1325 = vlaneseq
        %v1326 = vshrl.u32 %v1325, 7
        %v1327 = vsub.s32 %v1324, %v1326
        %v1328 = vrot.slane %v1320, %v1327
        %v1330 = vunpack.c.l.s4 1983009808
        %v1331 = vunpack.c.0.s8 %v1330
        %v1332 = vlaneseq
        %v1333 = vshrl.u32 %v1332, 7
        %v1334 = vsub.s32 %v1331, %v1333
        %v1335 = vrot.slane %v1321, %v1334
        %v1336 = vcombine.low %v1312, %v1328
        %v1337 = vcombine.high %v1312, %v1328
        %v1339 = vunpack.c.l.s4 1934713408
        %v1340 = vunpack.c.0.s8 %v1339
        %v1341 = vlaneseq
        %v1342 = vshrl.u32 %v1341, 7
        %v1343 = vsub.s32 %v1340, %v1342
        %v1344 = vrot.slane %v1336, %v1343
        %v1346 = vunpack.c.l.s4 1934713408
        %v1347 = vunpack.c.0.s8 %v1346
        %v1348 = vlaneseq
        %v1349 = vshrl.u32 %v1348, 7
        %v1350 = vsub.s32 %v1347, %v1349
        %v1351 = vrot.slane %v1337, %v1350
        %v1352 = vcombine.low %v1319, %v1335
        %v1353 = vcombine.high %v1319, %v1335
        %v1355 = vunpack.c.l.s4 1934713408
        %v1356 = vunpack.c.0.s8 %v1355
        %v1357 = vlaneseq
        %v1358 = vshrl.u32 %v1357, 7
        %v1359 = vsub.s32 %v1356, %v1358
        %v1360 = vrot.slane %v1352, %v1359
        %v1362 = vunpack.c.l.s4 1934713408
        %v1363 = vunpack.c.0.s8 %v1362
        %v1364 = vlaneseq
        %v1365 = vshrl.u32 %v1364, 7
        %v1366 = vsub.s32 %v1363, %v1365
        %v1367 = vrot.slane %v1353, %v1366
        %v1368 = vcombine.high %v1344, 0.0
        %v1369 = vcombine.high %v1351, 0.0
        %v1370 = vcombine.high %v1360, 0.0
        %v1371 = vcombine.high %v1367, 0.0
        %v1372 = vcombine.low %v1344, %v1351
        %v1374 = vunpack.c.l.s4 1983009808
        %v1375 = vunpack.c.0.s8 %v1374
        %v1376 = vlaneseq
        %v1377 = vshrl.u32 %v1376, 7
        %v1378 = vsub.s32 %v1375, %v1377
        %v1379 = vrot.slane %v1372, %v1378
        %v1380 = vcombine.low %v1368, %v1369
        %v1382 = vunpack.c.l.s4 1983009808
        %v1383 = vunpack.c.0.s8 %v1382
        %v1384 = vlaneseq
        %v1385 = vshrl.u32 %v1384, 7
        %v1386 = vsub.s32 %v1383, %v1385
        %v1387 = vrot.slane %v1380, %v1386
        %v1388 = vcombine.low %v1360, %v1367
        %v1390 = vunpack.c.l.s4 1983009808
        %v1391 = vunpack.c.0.s8 %v1390
        %v1392 = vlaneseq
        %v1393 = vshrl.u32 %v1392, 7
        %v1394 = vsub.s32 %v1391, %v1393
        %v1395 = vrot.slane %v1388, %v1394
        %v1396 = vcombine.low %v1370, %v1371
        %v1398 = vunpack.c.l.s4 1983009808
        %v1399 = vunpack.c.0.s8 %v1398
        %v1400 = vlaneseq
        %v1401 = vshrl.u32 %v1400, 7
        %v1402 = vsub.s32 %v1399, %v1401
        %v1403 = vrot.slane %v1396, %v1402
        %v1404 = vcombine.low %v1379, %v1387
        %v1405 = vcombine.high %v1379, %v1387
        %v1407 = vunpack.c.l.s4 1934713408
        %v1408 = vunpack.c.0.s8 %v1407
        %v1409 = vlaneseq
        %v1410 = vshrl.u32 %v1409, 7
        %v1411 = vsub.s32 %v1408, %v1410
        %v1412 = vrot.slane %v1404, %v1411
        %v1414 = vunpack.c.l.s4 1934713408
        %v1415 = vunpack.c.0.s8 %v1414
        %v1416 = vlaneseq
        %v1417 = vshrl.u32 %v1416, 7
        %v1418 = vsub.s32 %v1415, %v1417
        %v1419 = vrot.slane %v1405, %v1418
        %v1420 = vcombine.low %v1395, %v1403
        %v1421 = vcombine.high %v1395, %v1403
        %v1423 = vunpack.c.l.s4 1934713408
        %v1424 = vunpack.c.0.s8 %v1423
        %v1425 = vlaneseq
        %v1426 = vshrl.u32 %v1425, 7
        %v1427 = vsub.s32 %v1424, %v1426
        %v1428 = vrot.slane %v1420, %v1427
        %v1430 = vunpack.c.l.s4 1934713408
        %v1431 = vunpack.c.0.s8 %v1430
        %v1432 = vlaneseq
        %v1433 = vshrl.u32 %v1432, 7
        %v1434 = vsub.s32 %v1431, %v1433
        %v1435 = vrot.slane %v1421, %v1434
        %v1436 = vcombine.low %v1412, %v1428
        %v1437 = vcombine.high %v1412, %v1428
        %v1438 = vcombine.low %v1419, %v1435
        %v1439 = vcombine.high %v1419, %v1435
        %1441 = vrot.lane.b32.xlu0 %v1437, 8
        %v1442 = vpop.permute.xlu0 %1441
        %1445 = vrot.lane.b32.xlu0 %v1438, 16
        %v1446 = vpop.permute.xlu0 %1445
        %1449 = vrot.lane.b32.xlu0 %v1439, 24
        %v1450 = vpop.permute.xlu0 %1449
        %v1452 = vsel %vm882, %v1436, %v1442
        %vm1453 = vcmask 130048
        %v1454 = vsel %vm1453, %v1452, %v1446
        %vm1455 = vcmask 195584
        %v1456 = vsel %vm1455, %v1454, %v1450
        %v1457 = vpack.c.bf16 %v1456, %v1456
        %s1458 = smul.addr %s30, 4
        %s1459 = scalar_lea.vmem [#allocation2], %s1458
        %vm1460 = vcmask 257024
        %1461 = vst.msk [vmem:[%s1459] sm:$0xf] %vm1460, %v1457
        %p1462 = scmp.eq.s32.totalorder %s30, 0
        // Predicated region
        $region53: #{tpu_custom_call.1} parent=39 // pred_check
          %p1463 = pneg %p1462
        $region54: #{tpu_custom_call.1} parent=39 // pred_check_branch
          %1465 = sbr.rel (%p1463) target = $region56
        $region55: #{tpu_custom_call.1} parent=39 // pred_region
          %v1466 = vld [vmem:[#allocation2] sm:$0xf]
          %v1469 = vpack.i.b16 0, %v1466
          %v1470 = vshrl.u32 %v1466, 16
          %v1471 = vshrl.u32 0, 16
          %v1472 = vpack.i.b16 %v1471, %v1470
          %v1475 = vunpack.c.l.s4 1983009808
          %v1476 = vunpack.c.0.s8 %v1475
          %v1477 = vlaneseq
          %v1478 = vshrl.u32 %v1477, 7
          %v1479 = vsub.s32 %v1476, %v1478
          %v1480 = vrot.slane %v1469, %v1479
          %v1481 = vcombine.high %v1480, 0
          %v1483 = vunpack.c.l.s4 1934713408
          %v1484 = vunpack.c.0.s8 %v1483
          %v1485 = vlaneseq
          %v1486 = vshrl.u32 %v1485, 7
          %v1487 = vsub.s32 %v1484, %v1486
          %v1488 = vrot.slane %v1480, %v1487
          %v1490 = vunpack.c.l.s4 1934713408
          %v1491 = vunpack.c.0.s8 %v1490
          %v1492 = vlaneseq
          %v1493 = vshrl.u32 %v1492, 7
          %v1494 = vsub.s32 %v1491, %v1493
          %v1495 = vrot.slane %v1481, %v1494
          %v1496 = vcombine.high %v1488, 0
          %v1497 = vcombine.high %v1495, 0
          %v1500 = vunpack.c.l.s4 1983009808
          %v1501 = vunpack.c.0.s8 %v1500
          %v1502 = vlaneseq
          %v1503 = vshrl.u32 %v1502, 7
          %v1504 = vsub.s32 %v1501, %v1503
          %v1505 = vrot.slane %v1472, %v1504
          %v1506 = vcombine.high %v1505, 0
          %v1508 = vunpack.c.l.s4 1934713408
          %v1509 = vunpack.c.0.s8 %v1508
          %v1510 = vlaneseq
          %v1511 = vshrl.u32 %v1510, 7
          %v1512 = vsub.s32 %v1509, %v1511
          %v1513 = vrot.slane %v1505, %v1512
          %v1515 = vunpack.c.l.s4 1934713408
          %v1516 = vunpack.c.0.s8 %v1515
          %v1517 = vlaneseq
          %v1518 = vshrl.u32 %v1517, 7
          %v1519 = vsub.s32 %v1516, %v1518
          %v1520 = vrot.slane %v1506, %v1519
          %v1521 = vcombine.high %v1513, 0
          %v1522 = vcombine.high %v1520, 0
          %v1523 = vld [vmem:[#allocation8] sm:$0xf]
          %v1524 = vld [vmem:[#allocation8 + $0x4] sm:$0xf]
          %v1525 = vld [vmem:[#allocation8 + $0x8] sm:$0xf]
          %v1526 = vld [vmem:[#allocation8 + $0xc] sm:$0xf]
          %v1527 = vld [vmem:[%s4] sm:$0x1]
          %v1529 = vlaneseq
          %v1530 = vshrl.u32 %v1529, 7
          %v1531 = vsub.s32 0, %v1530
          %v1532 = vrot.slane %v1527, %v1531
          %v1542 = vunpack.c.l.b16 %v1488
          %v1543 = vunpack.c.l.b16 %v1513
          %v1544 = vunpack.c.l.b16 %v1496
          %v1545 = vunpack.c.l.b16 %v1521
          %v1546 = vunpack.c.l.b16 %v1495
          %v1547 = vunpack.c.l.b16 %v1520
          %v1548 = vunpack.c.l.b16 %v1497
          %v1549 = vunpack.c.l.b16 %v1522
          %v1550 = vpack.c.b16 %v1542, %v1542
          %v1551 = vpack.c.b16 %v1543, %v1543
          %v1552 = vpack.c.b16 %v1544, %v1544
          %v1553 = vpack.c.b16 %v1545, %v1545
          %v1554 = vpack.c.b16 %v1546, %v1546
          %v1555 = vpack.c.b16 %v1547, %v1547
          %v1556 = vpack.c.b16 %v1548, %v1548
          %v1557 = vpack.c.b16 %v1549, %v1549
          %v1558 = vunpack.c.l.b16 %v1550
          %v1559 = vunpack.c.l.b16 %v1551
          %v1560 = vunpack.c.l.b16 %v1552
          %v1561 = vunpack.c.l.b16 %v1553
          %v1562 = vunpack.c.l.b16 %v1554
          %v1563 = vunpack.c.l.b16 %v1555
          %v1564 = vunpack.c.l.b16 %v1556
          %v1565 = vunpack.c.l.b16 %v1557
          %v1566 = vrot.slane %v1559, 7
          %vm1567 = vcmask 1041409
          %v1568 = vsel %vm1567, %v1566, %v1558
          %v1569 = vrot.slane %v1560, 6
          %vm1570 = vcmask 1042434
          %v1571 = vsel %vm1570, %v1569, %v1568
          %v1572 = vrot.slane %v1561, 5
          %vm1573 = vcmask 1043459
          %v1574 = vsel %vm1573, %v1572, %v1571
          %v1575 = vrot.slane %v1562, 4
          %vm1576 = vcmask 1044484
          %v1577 = vsel %vm1576, %v1575, %v1574
          %v1578 = vrot.slane %v1563, 3
          %vm1579 = vcmask 1045509
          %v1580 = vsel %vm1579, %v1578, %v1577
          %v1581 = vrot.slane %v1564, 2
          %vm1582 = vcmask 1046534
          %v1583 = vsel %vm1582, %v1581, %v1580
          %v1584 = vrot.slane %v1565, 1
          %vm1585 = vcmask 1047559
          %v1586 = vsel %vm1585, %v1584, %v1583
          %v1587 = vpack.c.b16 %v1586, %v1586
          %v1592 = vunpack.c.l.b16 %v1523
          %v1593 = vunpack.c.l.b16 %v1524
          %v1594 = vunpack.c.l.b16 %v1525
          %v1595 = vunpack.c.l.b16 %v1526
          %v1596 = vpack.c.b16 %v1593, %v1592
          %v1597 = vpack.c.b16 %v1595, %v1594
          %v1601 = vsel %vm329, %v1587, 0
          %1603 = vmatprep.subr.bf16.mxu0 0
          %1604 = vmatpush1.bf16.msra.mxu0 %v1596
          %1605 = vmatprep.subr.bf16.mxu0 0
          %1606 = vmatpush1.bf16.msra.mxu0 %v1597
          %1607 = vmatprep.subr.bf16.mxu0 0
          %1608 = vmatpush1.bf16.msra.mxu0 0
          %1609 = vmatprep.subr.bf16.mxu0 0
          %1610 = vmatpush1.bf16.msra.mxu0 0
          %1611 = vmatprep.subr.bf16.mxu0 0
          %1612 = vmatpush1.bf16.msra.mxu0 0
          %1613 = vmatprep.subr.bf16.mxu0 0
          %1614 = vmatpush1.bf16.msra.mxu0 0
          %1615 = vmatprep.subr.bf16.mxu0 0
          %1616 = vmatpush1.bf16.msra.mxu0 0
          %1617 = vmatprep.subr.bf16.mxu0 0
          %1618 = vmatpush1.bf16.msra.mxu0 0
          %1619 = vmatprep.subr.bf16.mxu0 0
          %1620 = vmatpush1.bf16.msra.mxu0 0
          %1621 = vmatprep.subr.bf16.mxu0 0
          %1622 = vmatpush1.bf16.msra.mxu0 0
          %1623 = vmatprep.subr.bf16.mxu0 0
          %1624 = vmatpush1.bf16.msra.mxu0 0
          %1625 = vmatprep.subr.bf16.mxu0 0
          %1626 = vmatpush1.bf16.msra.mxu0 0
          %1627 = vmatprep.subr.bf16.mxu0 0
          %1628 = vmatpush1.bf16.msra.mxu0 0
          %1629 = vmatprep.subr.bf16.mxu0 0
          %1630 = vmatpush1.bf16.msra.mxu0 0
          %1631 = vmatprep.subr.bf16.mxu0 0
          %1632 = vmatpush1.bf16.msra.mxu0 0
          %1633 = vmatprep.subr.bf16.mxu0 0
          %1634 = vmatpush1.bf16.msra.mxu0 0
          %1635 = vmatprep.mubr.bf16.mxu0 0
          %1636 = vmatmul.mubr.bf16.gmra.mrb[0].mxu0 %v1601
          %v1637 = vpop.f32.mrb[0].mxu0
          %v1638 = vadd.f32 %v1532, %v1637
          %v1639 = vpop.f32.mrb[0].mxu0
          %v1640 = vpop.f32.mrb[0].mxu0
          %v1641 = vpop.f32.mrb[0].mxu0
          %1642 = vdwg.mxu0
          %1643 = vst [vmem:[%s300] sm:$0xff] %v1638
        $region56: #{tpu_custom_call.1} parent=39 // pred_fallthru
          _
        %s1644 = sand.u32 %s167, 1
        %s1645 = scalar_lea.sflag [#allocation5], %s1644
        %s1646 = sand.u32 %s167, 1
        %s1647 = smul.addr %s1646, 8
        %s1648 = scalar_lea.vmem [#allocation9], %s1647
        // Predicated region
        $region57: #{tpu_custom_call.1} parent=39 // pred_check
          %p1649 = pneg %p177
        $region58: #{tpu_custom_call.1} parent=39 // pred_check_branch
          %1651 = sbr.rel (%p1649) target = $region60
        $region59: #{tpu_custom_call.1} parent=39 // pred_region
          %s1653 = ssub.s32 128, 128
          %1654 = vsyncadd %s1645, %s1653
          %s1655 = sadd.s32 %s29, %s28
          %s1656 = smul.addr %s1655, 128
          %s1657 = scalar_lea.hbm %s5, %s1656
          %s1659 = sshll.u32 %s1648, 4
          %s1660 = int_to_ptr.vmem [resolvable:$true] %s1659
          %1662 = dma.vmem_to_hbm [thread:$0]  %s1660, 128, %s1657, %s1645
        $region60: #{tpu_custom_call.1} parent=39 // pred_fallthru
          _
      $region40: #{tpu_custom_call.1} parent=5 // pred_fallthru
        _
      %p1663 = scmp.le.s32.totalorder 2, %s18
      // Predicated region
      $region61: #{tpu_custom_call.1} parent=5 // pred_check
        %p1664 = pneg %p1663
      $region62: #{tpu_custom_call.1} parent=5 // pred_check_branch
        %1666 = sbr.rel (%p1664) target = $region64
      $region63: #{tpu_custom_call.1} parent=5 // pred_region
        %s1667 = ssub.s32 %s18, 2
        // Predicated region
        $region65: #{tpu_custom_call.1} parent=63 // pred_check
          %p1668 = pneg %p183
        $region66: #{tpu_custom_call.1} parent=63 // pred_check_branch
          %1670 = sbr.rel (%p1668) target = $region68
        $region67: #{tpu_custom_call.1} parent=63 // pred_region
          %s1671 = sand.u32 %s168, 1
          %s1672 = scalar_lea.sflag [#allocation5], %s1671
          %s1673 = sand.u32 %s168, 1
          %s1674 = smul.addr %s1673, 8
          %s1675 = scalar_lea.vmem [#allocation9], %s1674
          %1676 = dma.done %s1672, 128
        $region68: #{tpu_custom_call.1} parent=63 // pred_fallthru
          _
      $region64: #{tpu_custom_call.1} parent=5 // pred_fallthru
        _
    $region6: #{tpu_custom_call.1} parent=1 // loop_footer
      %s22 = sadd.s32 1, %s18
    $region7: #{tpu_custom_call.1} parent=1 // loop_footer_branch
      %17 = sbr.rel target = $region3
    $region8: #{tpu_custom_call.1} parent=1 // loop_exit
      _
    %1677 = vsyncpa [#allocation4], 1
    %s1678 = scalar_lea.sflag [#allocation4], 1
    %1679 = vsyncpa %s1678, 1
    %1680 = vsyncpa [#allocation7], 1
    %1681 = vsyncpa [#allocation5], 1
    %s1682 = scalar_lea.sflag [#allocation5], 1
    %1683 = vsyncpa %s1682, 1

</llo_original>
